<compile_context>
chip_gen: v7x
topology: tpu7x:2x2x1
jax: 0.10.0
libtpu: 0.0.40
codegen_flags: <defaults>
</compile_context>

<pallas_src>
import functools

import jax
import jax.numpy as jnp
from jax import lax
from jax.experimental import pallas as pl
from jax.experimental.pallas import tpu as pltpu


def _memory_block_kernel(x_ref, onehot_g_ref, onehot_t_ref, beta_ref,
                         phiw_ref, phib_ref, mbs_t_ref, mb_ref, wzw_ref, wzb_ref,
                         z_ref, qsum_ref, *,
                         eps, bt, chunk, n_chunks, hw_valid, mask_cols, exp_bf16):
    onehot_g = onehot_g_ref[...]    # (C, G)  f32, rows pre-scaled by gamma
    onehot_t = onehot_t_ref[...]    # (G, C)  f32 (unscaled group membership)
    beta = beta_ref[...]            # (C, 1)  f32
    phi_w = phiw_ref[...]           # (Ci, C) bf16
    phi_b = phib_ref[...]           # (Ci, 1) f32
    mbs_t = mbs_t_ref[...]          # (M, Ci) bf16, pre-scaled by Ci**-0.5
    mb = mb_ref[...]                # (Ci, M) bf16 (unscaled)
    wz_w = wzw_ref[...]             # (C, Ci) bf16
    wz_b = wzb_ref[...]             # (C, 1)  f32

    G, C = onehot_t.shape
    inv_denom = 1.0 / float(hw_valid * (C // G))
    f32, bf16 = jnp.float32, jnp.bfloat16

    def batch_body(bi, qtot):
        # ---- GroupNorm stats on the full (C, hw_pad) slab (lane reductions) ---
        qb = x_ref[bi].astype(f32)                                 # (C, hw_pad)
        s = jnp.sum(qb, axis=1, keepdims=True)                     # (C, 1)
        ssq = jnp.sum(qb * qb, axis=1, keepdims=True)              # (C, 1)
        # tiny group-space round trip (K<=C, N=1 matmuls -> negligible MXU time)
        mean_g = jnp.dot(onehot_t, s, preferred_element_type=f32) * inv_denom   # (G,1)
        ex2_g = jnp.dot(onehot_t, ssq, preferred_element_type=f32) * inv_denom  # (G,1)
        var_g = jnp.maximum(ex2_g - mean_g * mean_g, 0.0)          # clamp (E[x^2]-E[x]^2)
        rstd_g = lax.rsqrt(var_g + eps)                            # (G, 1)
        scale_c = jnp.dot(onehot_g, rstd_g, preferred_element_type=f32)            # (C,1)
        shift_c = jnp.dot(onehot_g, mean_g * rstd_g,
                          preferred_element_type=f32) - beta                       # (C,1)

        def chunk_body(ck, qt):
            start = pl.multiple_of(ck * chunk, chunk)
            qc = x_ref[bi, :, pl.ds(start, chunk)]                 # (C, ch) raw q
            # GroupNorm apply: per-channel scale/shift, VPU lane-broadcast only.
            qn = (qc * scale_c - shift_c).astype(bf16)             # (C, ch)

            # phi: 1x1 conv == (Ci, C) @ (C, ch), bf16 in / f32 accumulate.
            phi_x = jnp.dot(phi_w, qn, preferred_element_type=f32) + phi_b        # (Ci, ch)

            # memory-bank attention: softmax over the M axis.
            f1 = jnp.dot(mbs_t, phi_x.astype(bf16),
                         preferred_element_type=f32)                              # (M, ch)
            f1 = f1 - jnp.max(f1, axis=0, keepdims=True)
            if exp_bf16:                       # bf16 EUP on v6e/v7x
                e16 = jnp.exp(f1.astype(bf16))
                esum = jnp.sum(e16.astype(f32), axis=0, keepdims=True)            # (1, ch)
            else:                              # v5e EUP has no bf16
                e32 = jnp.exp(f1)
                esum = jnp.sum(e32, axis=0, keepdims=True)
                e16 = e32.astype(bf16)
            y1 = jnp.dot(mb, e16, preferred_element_type=f32)                     # (Ci, ch)
            # normalize after the matmul: Ci*ch multiplies instead of M*ch.
            y1 = y1 * pl.reciprocal(esum, approx=True)

            # partial sum of |phi_x - y1| (padded columns masked out).
            diff = jnp.abs(phi_x - y1)
            if mask_cols:
                col = start + lax.broadcasted_iota(jnp.int32, (1, chunk), 1)
                diff = jnp.where(col < hw_valid, diff, 0.0)
            qt = qt + jnp.sum(diff)

            # W_z1: 1x1 conv (Ci -> C) + residual add with raw q.
            wy = jnp.dot(wz_w, y1.astype(bf16), preferred_element_type=f32) + wz_b  # (C, ch)
            z_ref[bi, :, pl.ds(start, chunk)] = (qc + wy).astype(z_ref.dtype)
            return qt

        return lax.fori_loop(0, n_chunks, chunk_body, qtot)

    qtot = lax.fori_loop(0, bt, batch_body, jnp.float32(0.0))
    qsum_ref[...] = jnp.full(qsum_ref.shape, qtot, dtype=jnp.float32)


def _round_up(x, m):
    return (x + m - 1) // m * m


def _pick_batch_block(b, cols, target_cols=4096):
    """Fuse batch elements per grid step when the per-image column count is small.

    Keeps >= 2 grid steps when b >= 2 so multi-TensorCore chips (v7x) can split
    the "parallel" batch axis; the extra step costs ~0.35us on single-core chips.
    """
    bt = 1
    for d in range(1, b + 1):
        if b % d == 0 and d * cols <= target_cols and (b // d) >= min(b, 2):
            bt = d
    return bt


def _vmem_capacity_bytes():
    try:
        return int(pltpu.get_tpu_info().vmem_capacity_bytes)
    except Exception:
        return 128 * 2 ** 20


def _default_exp_bf16():
    # bf16 EUP exists on v6e / v7x; keep f32 exp on older generations (v5e, v4).
    try:
        kind = jax.devices()[0].device_kind.lower()
    except Exception:
        return False
    return ("v6" in kind) or ("v7" in kind)


def memory_block_forward(x, params, *, num_groups=32, eps=1e-6,
                         batch_block=None, max_chunk_cols=1024):
    """x: (B, 3*C, H, W) NCHW, like the PyTorch module's forward input."""
    b, c3, h, w = x.shape
    C = c3 // 3
    Ci = params["phi_w"].shape[0]
    M = params["mb"].shape[1]
    hw = h * w

    f32, bf16 = jnp.float32, jnp.bfloat16

    # Lane-dense spatial extent: pad HW up to a multiple of 128 and of the
    # in-kernel chunk width so every load/store is an unmasked full-lane op.
    hw_lane = _round_up(hw, 128)
    chunk = min(max_chunk_cols, hw_lane)
    hw_pad = _round_up(hw_lane, chunk)
    n_chunks = hw_pad // chunk
    mask_cols = hw_pad != hw

    if hw_pad == hw:
        # No padding needed: slice the middle channel-third via the index_map
        # (no extra HBM copy).
        q_in = x.reshape(b, c3, hw)
        c_blk = 1
    else:
        # Pad only the q third. Zero-padded columns contribute 0 to the GN sums,
        # the qloss masks them, and the padded z columns are sliced away below.
        q_in = jnp.pad(x.reshape(b, c3, hw)[:, C:2 * C, :],
                       ((0, 0), (0, 0), (0, hw_pad - hw)))
        c_blk = 0

    gamma = params["gamma"].astype(f32)
    beta = params["beta"].reshape(C, 1).astype(f32)
    cg = C // num_groups
    onehot = (jnp.arange(C)[:, None] // cg ==
              jnp.arange(num_groups)[None, :]).astype(f32)      # (C, G)
    onehot_gamma = onehot * gamma[:, None]                      # fold GN affine scale
    onehot_t = onehot.T                                         # (G, C)

    phi_w = params["phi_w"].astype(bf16)                        # (Ci, C)
    phi_b = params["phi_b"].reshape(Ci, 1).astype(f32)
    mb = params["mb"]                                           # (Ci, M)
    mbs_t = (mb.T * (float(Ci) ** -0.5)).astype(bf16)           # (M, Ci), pre-scaled
    mb_bf = mb.astype(bf16)                                     # (Ci, M), unscaled
    wz_w = params["wz_w"].astype(bf16)                          # (C, Ci)
    wz_b = params["wz_b"].reshape(C, 1).astype(f32)

    if batch_block is None:
        batch_block = _pick_batch_block(b, hw_pad)
    assert b % batch_block == 0, "batch_block must divide the batch size"
    nb = b // batch_block

    # VMEM budget: double-buffered q/z blocks + chunked intermediates + weights,
    # capped at ~75% of this generation's physical VMEM (~48 MiB on v7x).
    block_bytes = batch_block * C * hw_pad * 4
    chunk_bytes = chunk * (3 * C + 4 * Ci + 3 * M) * 4
    weight_bytes = (2 * Ci * C + 2 * Ci * M) * 2 + (2 * C * num_groups + 3 * C + Ci) * 4
    est = 4 * block_bytes + chunk_bytes + weight_bytes
    cap = int(0.75 * _vmem_capacity_bytes())
    vmem_limit = int(min(cap, max(32 * 2 ** 20, 2 * est)))

    kernel = functools.partial(
        _memory_block_kernel, eps=eps, bt=batch_block, chunk=chunk,
        n_chunks=n_chunks, hw_valid=hw, mask_cols=mask_cols,
        exp_bf16=_default_exp_bf16())

    z_p, qsum = pl.pallas_call(
        kernel,
        out_shape=(
            jax.ShapeDtypeStruct((b, C, hw_pad), x.dtype),
            jax.ShapeDtypeStruct((nb, 1, 128), jnp.float32),
        ),
        grid_spec=pltpu.PrefetchScalarGridSpec(
            num_scalar_prefetch=0,
            grid=(nb,),
            in_specs=[
                # q block (middle channel-third when unpadded; c_blk selects it)
                pl.BlockSpec((batch_block, C, hw_pad), lambda i: (i, c_blk, 0)),
                pl.BlockSpec((C, num_groups), lambda i: (0, 0)),   # onehot * gamma
                pl.BlockSpec((num_groups, C), lambda i: (0, 0)),   # onehot^T
                pl.BlockSpec((C, 1), lambda i: (0, 0)),            # beta
                pl.BlockSpec((Ci, C), lambda i: (0, 0)),           # phi weight (bf16)
                pl.BlockSpec((Ci, 1), lambda i: (0, 0)),           # phi bias
                pl.BlockSpec((M, Ci), lambda i: (0, 0)),           # mb^T * Ci^-0.5 (bf16)
                pl.BlockSpec((Ci, M), lambda i: (0, 0)),           # mb (bf16)
                pl.BlockSpec((C, Ci), lambda i: (0, 0)),           # W_z1 weight (bf16)
                pl.BlockSpec((C, 1), lambda i: (0, 0)),            # W_z1 bias
            ],
            out_specs=(
                pl.BlockSpec((batch_block, C, hw_pad), lambda i: (i, 0, 0)),  # z
                pl.BlockSpec((1, 1, 128), lambda i: (i, 0, 0)),               # qloss partials
            ),
        ),
        compiler_params=pltpu.CompilerParams(
            dimension_semantics=("parallel",),
            vmem_limit_bytes=vmem_limit,
        ),
    )(q_in, onehot_gamma, onehot_t, beta, phi_w, phi_b, mbs_t, mb_bf, wz_w, wz_b)

    qloss = jnp.sum(qsum[:, 0, 0]) / float(b * hw * Ci)
    z = z_p[:, :, :hw].reshape(b, C, h, w)
    return z, qloss


def memory_block_ref(x, params, num_groups=32, eps=1e-6, mxu_dtype=jnp.float32):
    """Pure-JAX reference matching the PyTorch forward.

    mxu_dtype=float32   -> faithful f32 reference.
    mxu_dtype=bfloat16  -> matmul operands cast like the kernel (tight check).
    """
    b, c3, h, w = x.shape
    C = c3 // 3
    Ci = params["phi_w"].shape[0]
    q = x[:, C:2 * C]                                           # (b, C, h, w)
    qg = q.reshape(b, num_groups, C // num_groups, h, w)
    mean = qg.mean(axis=(2, 3, 4), keepdims=True)
    var = qg.var(axis=(2, 3, 4), keepdims=True)
    qn = ((qg - mean) * lax.rsqrt(var + eps)).reshape(b, C, h, w)
    qn = qn * params["gamma"][None, :, None, None] + params["beta"][None, :, None, None]
    qn_cl = qn.reshape(b, C, h * w).transpose(0, 2, 1)          # (b, hw, C)

    phi_x = jnp.einsum("bnc,ic->bni", qn_cl.astype(mxu_dtype),
                       params["phi_w"].astype(mxu_dtype),
                       preferred_element_type=jnp.float32) + params["phi_b"][None, None, :]
    mb = params["mb"]
    mbs = (mb * (float(Ci) ** -0.5)).astype(mxu_dtype)
    f1 = jnp.einsum("bni,im->bnm", phi_x.astype(mxu_dtype), mbs,
                    preferred_element_type=jnp.float32)
    p = jax.nn.softmax(f1, axis=-1)
    y1 = jnp.einsum("bnm,im->bni", p.astype(mxu_dtype), mb.astype(mxu_dtype),
                    preferred_element_type=jnp.float32)
    qloss = jnp.mean(jnp.abs(phi_x - y1))
    wy = jnp.einsum("bni,ci->bnc", y1.astype(mxu_dtype),
                    params["wz_w"].astype(mxu_dtype),
                    preferred_element_type=jnp.float32) + params["wz_b"][None, None, :]
    z = q + wy.transpose(0, 2, 1).reshape(b, C, h, w)
    return z, qloss


if __name__ == "__main__":
    key = jax.random.PRNGKey(0)
    in_channels = 128                  # module default (GroupNorm needs 32 | C)
    inter = in_channels // 2           # 64
    M = 256
    b, h, w = 2, 8, 8

    k = jax.random.split(key, 8)
    # forward input has 3 * in_channels channels (the module splits into thirds)
    x = jax.random.normal(k[0], (b, 3 * in_channels, h, w), jnp.float32)

    params = dict(
        gamma=1.0 + 0.1 * jax.random.normal(k[1], (in_channels,), jnp.float32),
        beta=0.1 * jax.random.normal(k[2], (in_channels,), jnp.float32),
        phi_w=jax.random.normal(k[3], (inter, in_channels), jnp.float32) * 0.05,
        phi_b=jax.random.normal(k[4], (inter,), jnp.float32) * 0.05,
        mb=jax.random.normal(k[5], (inter, M), jnp.float32),
        # the module initializes W_z1 to zero; use small nonzero values here so
        # the W_z1 + residual path is actually exercised numerically.
        wz_w=jax.random.normal(k[6], (in_channels, inter), jnp.float32) * 0.05,
        wz_b=jax.random.normal(k[7], (in_channels,), jnp.float32) * 0.05,
    )

    z, qloss = memory_block_forward(x, params)
    jax.block_until_ready((z, qloss))

    # tight check vs a reference using the same bf16 MXU operand precision
    z_bf, ql_bf = memory_block_ref(x, params, mxu_dtype=jnp.bfloat16)
    assert jnp.allclose(z, z_bf, atol=1e-2, rtol=1e-2), "z mismatch vs bf16 ref"
    assert jnp.allclose(qloss, ql_bf, atol=1e-2, rtol=1e-2), "qloss mismatch vs bf16 ref"

    # loose check vs the pure f32 reference (bf16 MXU rounding is the only gap)
    z_f32, ql_f32 = memory_block_ref(x, params, mxu_dtype=jnp.float32)
    assert jnp.allclose(z, z_f32, atol=3e-2, rtol=3e-2), "z mismatch vs f32 ref"
    assert jnp.allclose(qloss, ql_f32, atol=3e-2, rtol=3e-2), "qloss mismatch vs f32 ref"

    print("KERNEL_OK")
</pallas_src>

<mosaic_0001>
module attributes {stable_mosaic.version = 11 : i64} {
  func.func @_memory_block_kernel(%arg0: i32, %arg1: memref<1x128x128xf32, #tpu.memory_space<vmem>>, %arg2: memref<128x32xf32, #tpu.memory_space<vmem>>, %arg3: memref<32x128xf32, #tpu.memory_space<vmem>>, %arg4: memref<128x1xf32, #tpu.memory_space<vmem>>, %arg5: memref<64x128xbf16, #tpu.memory_space<vmem>>, %arg6: memref<64x1xf32, #tpu.memory_space<vmem>>, %arg7: memref<256x64xbf16, #tpu.memory_space<vmem>>, %arg8: memref<64x256xbf16, #tpu.memory_space<vmem>>, %arg9: memref<128x64xbf16, #tpu.memory_space<vmem>>, %arg10: memref<128x1xf32, #tpu.memory_space<vmem>>, %arg11: memref<1x128x128xf32, #tpu.memory_space<vmem>>, %arg12: memref<1x1x128xf32, #tpu.memory_space<vmem>>) attributes {dimension_semantics = [#tpu.dimension_semantics<parallel>], iteration_bounds = array<i64: 2>, scalar_prefetch = 0 : i64, scratch_operands = 0 : i64, tpu.core_type = #tpu.core_type<tc>, window_params = [{transform_indices = @transform_0, window_bounds = array<i64: 1, 128, 128>}, {pipeline_mode = #tpu.pipeline_mode<synchronous>, transform_indices = @transform_1, window_bounds = array<i64: 128, 32>}, {pipeline_mode = #tpu.pipeline_mode<synchronous>, transform_indices = @transform_2, window_bounds = array<i64: 32, 128>}, {pipeline_mode = #tpu.pipeline_mode<synchronous>, transform_indices = @transform_3, window_bounds = array<i64: 128, 1>}, {pipeline_mode = #tpu.pipeline_mode<synchronous>, transform_indices = @transform_4, window_bounds = array<i64: 64, 128>}, {pipeline_mode = #tpu.pipeline_mode<synchronous>, transform_indices = @transform_5, window_bounds = array<i64: 64, 1>}, {pipeline_mode = #tpu.pipeline_mode<synchronous>, transform_indices = @transform_6, window_bounds = array<i64: 256, 64>}, {pipeline_mode = #tpu.pipeline_mode<synchronous>, transform_indices = @transform_7, window_bounds = array<i64: 64, 256>}, {pipeline_mode = #tpu.pipeline_mode<synchronous>, transform_indices = @transform_8, window_bounds = array<i64: 128, 64>}, {pipeline_mode = #tpu.pipeline_mode<synchronous>, transform_indices = @transform_9, window_bounds = array<i64: 128, 1>}, {transform_indices = @transform_10, window_bounds = array<i64: 1, 128, 128>}, {transform_indices = @transform_11, window_bounds = array<i64: 1, 1, 128>}]} {
    %c0 = arith.constant 0 : index
    %c0_0 = arith.constant 0 : index
    %0 = vector.load %arg2[%c0, %c0_0] : memref<128x32xf32, #tpu.memory_space<vmem>>, vector<128x32xf32>
    %c0_1 = arith.constant 0 : index
    %c0_2 = arith.constant 0 : index
    %1 = vector.load %arg3[%c0_1, %c0_2] : memref<32x128xf32, #tpu.memory_space<vmem>>, vector<32x128xf32>
    %c0_3 = arith.constant 0 : index
    %c0_4 = arith.constant 0 : index
    %2 = vector.load %arg4[%c0_3, %c0_4] : memref<128x1xf32, #tpu.memory_space<vmem>>, vector<128x1xf32>
    %c0_5 = arith.constant 0 : index
    %c0_6 = arith.constant 0 : index
    %3 = vector.load %arg5[%c0_5, %c0_6] : memref<64x128xbf16, #tpu.memory_space<vmem>>, vector<64x128xbf16>
    %c0_7 = arith.constant 0 : index
    %c0_8 = arith.constant 0 : index
    %4 = vector.load %arg6[%c0_7, %c0_8] : memref<64x1xf32, #tpu.memory_space<vmem>>, vector<64x1xf32>
    %c0_9 = arith.constant 0 : index
    %c0_10 = arith.constant 0 : index
    %5 = vector.load %arg7[%c0_9, %c0_10] : memref<256x64xbf16, #tpu.memory_space<vmem>>, vector<256x64xbf16>
    %c0_11 = arith.constant 0 : index
    %c0_12 = arith.constant 0 : index
    %6 = vector.load %arg8[%c0_11, %c0_12] : memref<64x256xbf16, #tpu.memory_space<vmem>>, vector<64x256xbf16>
    %c0_13 = arith.constant 0 : index
    %c0_14 = arith.constant 0 : index
    %7 = vector.load %arg9[%c0_13, %c0_14] : memref<128x64xbf16, #tpu.memory_space<vmem>>, vector<128x64xbf16>
    %c0_15 = arith.constant 0 : index
    %c0_16 = arith.constant 0 : index
    %8 = vector.load %arg10[%c0_15, %c0_16] : memref<128x1xf32, #tpu.memory_space<vmem>>, vector<128x1xf32>
    %cst = arith.constant 0.000000e+00 : f32
    %c0_i32 = arith.constant 0 : i32
    %9 = arith.index_cast %c0_i32 : i32 to index
    %c0_17 = arith.constant 0 : index
    %c0_18 = arith.constant 0 : index
    %10 = vector.load %arg1[%9, %c0_17, %c0_18] : memref<1x128x128xf32, #tpu.memory_space<vmem>>, vector<1x128x128xf32>
    %11 = vector.shape_cast %10 : vector<1x128x128xf32> to vector<128x128xf32>
    %cst_19 = arith.constant dense<0.000000e+00> : vector<128xf32>
    %12 = vector.multi_reduction <add>, %11, %cst_19 [1] : vector<128x128xf32> to vector<128xf32>
    %13 = vector.shape_cast %12 : vector<128xf32> to vector<128x1xf32>
    %14 = arith.mulf %11, %11 : vector<128x128xf32>
    %cst_20 = arith.constant dense<0.000000e+00> : vector<128xf32>
    %15 = vector.multi_reduction <add>, %14, %cst_20 [1] : vector<128x128xf32> to vector<128xf32>
    %16 = vector.shape_cast %15 : vector<128xf32> to vector<128x1xf32>
    %cst_21 = arith.constant dense<0.000000e+00> : vector<32x1xf32>
    %17 = tpu.matmul %1, %13, %cst_21 {dimension_numbers = #tpu.dot_dimension_numbers<[1], [0], [0], [1], [0, 0, 1, 1], [], []>} : vector<32x128xf32>, vector<128x1xf32>, vector<32x1xf32> -> vector<32x1xf32>
    %cst_22 = arith.constant 3.906250e-03 : f32
    %18 = vector.broadcast %cst_22 : f32 to vector<32x1xf32>
    %19 = arith.mulf %17, %18 : vector<32x1xf32>
    %cst_23 = arith.constant dense<0.000000e+00> : vector<32x1xf32>
    %20 = tpu.matmul %1, %16, %cst_23 {dimension_numbers = #tpu.dot_dimension_numbers<[1], [0], [0], [1], [0, 0, 1, 1], [], []>} : vector<32x128xf32>, vector<128x1xf32>, vector<32x1xf32> -> vector<32x1xf32>
    %cst_24 = arith.constant 3.906250e-03 : f32
    %21 = vector.broadcast %cst_24 : f32 to vector<32x1xf32>
    %22 = arith.mulf %20, %21 : vector<32x1xf32>
    %23 = arith.mulf %19, %19 : vector<32x1xf32>
    %24 = arith.subf %22, %23 : vector<32x1xf32>
    %cst_25 = arith.constant 0.000000e+00 : f32
    %25 = vector.broadcast %cst_25 : f32 to vector<32x1xf32>
    %26 = arith.maximumf %24, %25 : vector<32x1xf32>
    %cst_26 = arith.constant 9.99999997E-7 : f32
    %27 = vector.broadcast %cst_26 : f32 to vector<32x1xf32>
    %28 = arith.addf %26, %27 : vector<32x1xf32>
    %29 = math.rsqrt %28 : vector<32x1xf32>
    %cst_27 = arith.constant dense<0.000000e+00> : vector<128x1xf32>
    %30 = tpu.matmul %0, %29, %cst_27 {dimension_numbers = #tpu.dot_dimension_numbers<[1], [0], [0], [1], [0, 0, 1, 1], [], []>} : vector<128x32xf32>, vector<32x1xf32>, vector<128x1xf32> -> vector<128x1xf32>
    %31 = arith.mulf %19, %29 : vector<32x1xf32>
    %cst_28 = arith.constant dense<0.000000e+00> : vector<128x1xf32>
    %32 = tpu.matmul %0, %31, %cst_28 {dimension_numbers = #tpu.dot_dimension_numbers<[1], [0], [0], [1], [0, 0, 1, 1], [], []>} : vector<128x32xf32>, vector<32x1xf32>, vector<128x1xf32> -> vector<128x1xf32>
    %33 = arith.subf %32, %2 : vector<128x1xf32>
    %c0_i32_29 = arith.constant 0 : i32
    %c128_i32 = arith.constant 128 : i32
    %34 = arith.muli %c0_i32_29, %c128_i32 : i32
    %35 = tpu.assume_multiple %34, 128 : i32
    %36 = arith.index_cast %c0_i32 : i32 to index
    %c0_30 = arith.constant 0 : index
    %37 = arith.index_cast %35 : i32 to index
    %38 = vector.load %arg1[%36, %c0_30, %37] : memref<1x128x128xf32, #tpu.memory_space<vmem>>, vector<1x128x128xf32>
    %39 = vector.shape_cast %38 : vector<1x128x128xf32> to vector<128x128xf32>
    %40 = vector.broadcast %30 : vector<128x1xf32> to vector<128x128xf32>
    %41 = arith.mulf %39, %40 : vector<128x128xf32>
    %42 = vector.broadcast %33 : vector<128x1xf32> to vector<128x128xf32>
    %43 = arith.subf %41, %42 : vector<128x128xf32>
    %44 = arith.truncf %43 : vector<128x128xf32> to vector<128x128xbf16>
    %cst_31 = arith.constant dense<0.000000e+00> : vector<64x128xf32>
    %45 = tpu.matmul %3, %44, %cst_31 {dimension_numbers = #tpu.dot_dimension_numbers<[1], [0], [0], [1], [0, 0, 1, 1], [], []>} : vector<64x128xbf16>, vector<128x128xbf16>, vector<64x128xf32> -> vector<64x128xf32>
    %46 = vector.broadcast %4 : vector<64x1xf32> to vector<64x128xf32>
    %47 = arith.addf %45, %46 : vector<64x128xf32>
    %48 = arith.truncf %47 : vector<64x128xf32> to vector<64x128xbf16>
    %cst_32 = arith.constant dense<0.000000e+00> : vector<256x128xf32>
    %49 = tpu.matmul %5, %48, %cst_32 {dimension_numbers = #tpu.dot_dimension_numbers<[1], [0], [0], [1], [0, 0, 1, 1], [], []>} : vector<256x64xbf16>, vector<64x128xbf16>, vector<256x128xf32> -> vector<256x128xf32>
    %cst_33 = arith.constant dense<0xFF800000> : vector<128xf32>
    %50 = vector.multi_reduction <maximumf>, %49, %cst_33 [0] : vector<256x128xf32> to vector<128xf32>
    %51 = vector.shape_cast %50 : vector<128xf32> to vector<1x128xf32>
    %52 = vector.broadcast %51 : vector<1x128xf32> to vector<256x128xf32>
    %53 = arith.subf %49, %52 : vector<256x128xf32>
    %54 = math.exp %53 : vector<256x128xf32>
    %cst_34 = arith.constant dense<0.000000e+00> : vector<128xf32>
    %55 = vector.multi_reduction <add>, %54, %cst_34 [0] : vector<256x128xf32> to vector<128xf32>
    %56 = vector.shape_cast %55 : vector<128xf32> to vector<1x128xf32>
    %57 = arith.truncf %54 : vector<256x128xf32> to vector<256x128xbf16>
    %cst_35 = arith.constant dense<0.000000e+00> : vector<64x128xf32>
    %58 = tpu.matmul %6, %57, %cst_35 {dimension_numbers = #tpu.dot_dimension_numbers<[1], [0], [0], [1], [0, 0, 1, 1], [], []>} : vector<64x256xbf16>, vector<256x128xbf16>, vector<64x128xf32> -> vector<64x128xf32>
    %59 = tpu.reciprocal %56 {approx = true} : vector<1x128xf32> -> vector<1x128xf32>
    %60 = vector.broadcast %59 : vector<1x128xf32> to vector<64x128xf32>
    %61 = arith.mulf %58, %60 : vector<64x128xf32>
    %62 = arith.subf %47, %61 : vector<64x128xf32>
    %63 = math.absf %62 : vector<64x128xf32>
    %64 = tpu.iota {dimensions = array<i32: 1>} : vector<1x128xi32>
    %65 = vector.broadcast %35 : i32 to vector<1x128xi32>
    %66 = arith.addi %65, %64 : vector<1x128xi32>
    %c64_i32 = arith.constant 64 : i32
    %67 = vector.broadcast %c64_i32 : i32 to vector<1x128xi32>
    %68 = arith.cmpi slt, %66, %67 : vector<1x128xi32>
    %cst_36 = arith.constant 0.000000e+00 : f32
    %69 = vector.shape_cast %68 : vector<1x128xi1> to vector<1x128xi1>
    %70 = vector.broadcast %69 : vector<1x128xi1> to vector<64x128xi1>
    %71 = vector.broadcast %cst_36 : f32 to vector<64x128xf32>
    %72 = arith.select %70, %63, %71 : vector<64x128xi1>, vector<64x128xf32>
    %73 = vector.shape_cast %72 : vector<64x128xf32> to vector<1x64x128xf32>
    %cst_37 = arith.constant dense<0.000000e+00> : vector<1xf32>
    %74 = vector.multi_reduction <add>, %73, %cst_37 [1, 2] : vector<1x64x128xf32> to vector<1xf32>
    %75 = vector.shape_cast %74 : vector<1xf32> to vector<1x1x1xf32>
    %76 = vector.extract %75[0, 0, 0] : f32 from vector<1x1x1xf32>
    %77 = arith.addf %cst, %76 : f32
    %78 = arith.truncf %61 : vector<64x128xf32> to vector<64x128xbf16>
    %cst_38 = arith.constant dense<0.000000e+00> : vector<128x128xf32>
    %79 = tpu.matmul %7, %78, %cst_38 {dimension_numbers = #tpu.dot_dimension_numbers<[1], [0], [0], [1], [0, 0, 1, 1], [], []>} : vector<128x64xbf16>, vector<64x128xbf16>, vector<128x128xf32> -> vector<128x128xf32>
    %80 = vector.broadcast %8 : vector<128x1xf32> to vector<128x128xf32>
    %81 = arith.addf %79, %80 : vector<128x128xf32>
    %82 = arith.addf %39, %81 : vector<128x128xf32>
    %83 = arith.index_cast %c0_i32 : i32 to index
    %c0_39 = arith.constant 0 : index
    %84 = arith.index_cast %35 : i32 to index
    %85 = vector.load %arg11[%83, %c0_39, %84] : memref<1x128x128xf32, #tpu.memory_space<vmem>>, vector<1x128x128xf32>
    %86 = vector.shape_cast %85 : vector<1x128x128xf32> to vector<128x128xf32>
    %87 = vector.shape_cast %82 : vector<128x128xf32> to vector<1x128x128xf32>
    tpu.vector_store %arg11[%83, %c0_39, %84], %87 {strides = array<i32>} : memref<1x128x128xf32, #tpu.memory_space<vmem>>, vector<1x128x128xf32>,
    %c1_i32 = arith.constant 1 : i32
    %c1_i32_40 = arith.constant 1 : i32
    %88 = vector.broadcast %77 : f32 to vector<1x1x128xf32>
    %c0_41 = arith.constant 0 : index
    %c0_42 = arith.constant 0 : index
    %c0_43 = arith.constant 0 : index
    %89 = vector.load %arg12[%c0_41, %c0_42, %c0_43] : memref<1x1x128xf32, #tpu.memory_space<vmem>>, vector<1x1x128xf32>
    tpu.vector_store %arg12[%c0_41, %c0_42, %c0_43], %88 {strides = array<i32>} : memref<1x1x128xf32, #tpu.memory_space<vmem>>, vector<1x1x128xf32>,
    return
  }
  func.func @transform_0(%arg0: i32) -> (i32, i32, i32) {
    %c0_i32 = arith.constant 0 : i32
    %c0_i32_0 = arith.constant 0 : i32
    %c0_i32_1 = arith.constant 0 : i32
    return %arg0, %c0_i32, %c0_i32_0 : i32, i32, i32
  }
  func.func @transform_1(%arg0: i32) -> (i32, i32) {
    %c0_i32 = arith.constant 0 : i32
    %c0_i32_0 = arith.constant 0 : i32
    %c0_i32_1 = arith.constant 0 : i32
    return %c0_i32, %c0_i32_0 : i32, i32
  }
  func.func @transform_2(%arg0: i32) -> (i32, i32) {
    %c0_i32 = arith.constant 0 : i32
    %c0_i32_0 = arith.constant 0 : i32
    %c0_i32_1 = arith.constant 0 : i32
    return %c0_i32, %c0_i32_0 : i32, i32
  }
  func.func @transform_3(%arg0: i32) -> (i32, i32) {
    %c0_i32 = arith.constant 0 : i32
    %c0_i32_0 = arith.constant 0 : i32
    %c0_i32_1 = arith.constant 0 : i32
    return %c0_i32, %c0_i32_0 : i32, i32
  }
  func.func @transform_4(%arg0: i32) -> (i32, i32) {
    %c0_i32 = arith.constant 0 : i32
    %c0_i32_0 = arith.constant 0 : i32
    %c0_i32_1 = arith.constant 0 : i32
    return %c0_i32, %c0_i32_0 : i32, i32
  }
  func.func @transform_5(%arg0: i32) -> (i32, i32) {
    %c0_i32 = arith.constant 0 : i32
    %c0_i32_0 = arith.constant 0 : i32
    %c0_i32_1 = arith.constant 0 : i32
    return %c0_i32, %c0_i32_0 : i32, i32
  }
  func.func @transform_6(%arg0: i32) -> (i32, i32) {
    %c0_i32 = arith.constant 0 : i32
    %c0_i32_0 = arith.constant 0 : i32
    %c0_i32_1 = arith.constant 0 : i32
    return %c0_i32, %c0_i32_0 : i32, i32
  }
  func.func @transform_7(%arg0: i32) -> (i32, i32) {
    %c0_i32 = arith.constant 0 : i32
    %c0_i32_0 = arith.constant 0 : i32
    %c0_i32_1 = arith.constant 0 : i32
    return %c0_i32, %c0_i32_0 : i32, i32
  }
  func.func @transform_8(%arg0: i32) -> (i32, i32) {
    %c0_i32 = arith.constant 0 : i32
    %c0_i32_0 = arith.constant 0 : i32
    %c0_i32_1 = arith.constant 0 : i32
    return %c0_i32, %c0_i32_0 : i32, i32
  }
  func.func @transform_9(%arg0: i32) -> (i32, i32) {
    %c0_i32 = arith.constant 0 : i32
    %c0_i32_0 = arith.constant 0 : i32
    %c0_i32_1 = arith.constant 0 : i32
    return %c0_i32, %c0_i32_0 : i32, i32
  }
  func.func @transform_10(%arg0: i32) -> (i32, i32, i32) {
    %c0_i32 = arith.constant 0 : i32
    %c0_i32_0 = arith.constant 0 : i32
    %c0_i32_1 = arith.constant 0 : i32
    return %arg0, %c0_i32, %c0_i32_0 : i32, i32, i32
  }
  func.func @transform_11(%arg0: i32) -> (i32, i32, i32) {
    %c0_i32 = arith.constant 0 : i32
    %c0_i32_0 = arith.constant 0 : i32
    %c0_i32_1 = arith.constant 0 : i32
    return %arg0, %c0_i32, %c0_i32_0 : i32, i32, i32
  }
}

</mosaic_0001>

<llo_original>
// kernel: tpu_custom_call.1
$region0: #{tpu_custom_call.1}
  #allocation0 [shape = 'u32[]', space=smem, size = 0x4, offset = 0x4, fixed_abs, tag = 'smem constant byte address 0x4 - core index']
  #allocation1 [shape = 'u32[144,128]{1,0:T(1,128)}', space=vmem, size = 0x12000, scoped, tag = 'internal scratch']
  %s0 = inlined_call_operand.vmem [shape: f32[2,128,128], index: 0, kind: input, shape index: {}]
  %s1 = inlined_call_operand.vmem [shape: f32[128,32], index: 1, kind: input, shape index: {}]
  %s2 = inlined_call_operand.vmem [shape: f32[32,128], index: 2, kind: input, shape index: {}]
  %s3 = inlined_call_operand.vmem [shape: f32[128,1], index: 3, kind: input, shape index: {}]
  %s4 = inlined_call_operand.vmem [shape: bf16[64,128], index: 4, kind: input, shape index: {}]
  %s5 = inlined_call_operand.vmem [shape: f32[64,1], index: 5, kind: input, shape index: {}]
  %s6 = inlined_call_operand.vmem [shape: bf16[256,64], index: 6, kind: input, shape index: {}]
  %s7 = inlined_call_operand.vmem [shape: bf16[64,256], index: 7, kind: input, shape index: {}]
  %s8 = inlined_call_operand.vmem [shape: bf16[128,64], index: 8, kind: input, shape index: {}]
  %s9 = inlined_call_operand.vmem [shape: f32[128,1], index: 9, kind: input, shape index: {}]
  %s10 = inlined_call_operand.hbm [shape: f32[2,128,128], index: 10, kind: output, shape index: {0}]
  %s11 = inlined_call_operand.hbm [shape: f32[2,1,128], index: 11, kind: output, shape index: {1}]
  %12 = xla_tuple %s10, %s11
  %s13 = sld [smem:[#allocation0]]
  $region81: #{tpu_custom_call.1} parent=0
    _
  %s15 = ssub.s32 1, %s13
  %s16 = scalar_select 0, %s15, %s13
  $region1: #{tpu_custom_call.1} parent=0
    #allocation2 [shape = 'u8[131072]{0}', space=vmem, size = 0x20000, scoped, tag = 'output window, operand 0']
    #allocation3 [shape = 's32[2]{0}', space=sflag, size = 0x8, scoped, tag = 'scoped memory for tpu_custom_call.1']
    #allocation4 [shape = 'u8[1024]{0}', space=vmem, size = 0x400, scoped, tag = 'output window, operand 1']
    #allocation5 [shape = 's32[2]{0}', space=sflag, size = 0x8, scoped, tag = 'scoped memory for tpu_custom_call.1']
    %17 = vsyncpa [#allocation3], 0
    %s18 = scalar_lea.sflag [#allocation3], 1
    %19 = vsyncpa %s18, 0
    %20 = vsyncpa [#allocation5], 0
    %s21 = scalar_lea.sflag [#allocation5], 1
    %22 = vsyncpa %s21, 0
    loop: start=0, step=1, limit=4
    $region2: #{tpu_custom_call.1} parent=1 // loop_pre_header
      _
    $region3: #{tpu_custom_call.1} parent=1 // loop_header
      %s24 = sphi 0, %s28
      %p25 = scmp.ge.s32.totalorder %s24, 4
      %s34 = sphi 0, %s36
      %s37 = sphi 0, %s34
      %s38 = sphi 0, %s37
      %s54 = sphi 0, %s38
      %s58 = sphi 0, %s58
      %s60 = sphi 0, %s58
      %s61 = sphi 0, %s60
      %s75 = sphi 0, %s61
      %s79 = sphi 0, %s79
      %s81 = sphi 0, %s79
      %s82 = sphi 0, %s81
      %s96 = sphi 0, %s82
      %s100 = sphi 0, %s100
      %s102 = sphi 0, %s100
      %s103 = sphi 0, %s102
      %s117 = sphi 0, %s103
      %s121 = sphi 0, %s121
      %s123 = sphi 0, %s121
      %s124 = sphi 0, %s123
      %s138 = sphi 0, %s124
      %s142 = sphi 0, %s142
      %s144 = sphi 0, %s142
      %s145 = sphi 0, %s144
      %s159 = sphi 0, %s145
      %s163 = sphi 0, %s163
      %s165 = sphi 0, %s163
      %s166 = sphi 0, %s165
      %s180 = sphi 0, %s166
      %s184 = sphi 0, %s184
      %s186 = sphi 0, %s184
      %s187 = sphi 0, %s186
      %s201 = sphi 0, %s187
      %s205 = sphi 0, %s205
      %s207 = sphi 0, %s205
      %s208 = sphi 0, %s207
      %s222 = sphi 0, %s208
      %s226 = sphi 0, %s226
      %s228 = sphi 0, %s226
      %s229 = sphi 0, %s228
      %s243 = sphi 0, %s229
      %s249 = sphi 0, %s251
      %s252 = sphi 0, %s249
      %s253 = sphi 0, %s252
      %s269 = sphi 0, %s253
      %s275 = sphi 0, %s277
      %s278 = sphi 0, %s275
      %s279 = sphi 0, %s278
      %s295 = sphi 0, %s279
    $region4: #{tpu_custom_call.1} parent=1 // loop_header_branch
      %27 = sbr.rel (%p25) target = $region8
    $region5: #{tpu_custom_call.1} parent=1 // loop_body
      %s29 = ssub.s32 %s24, 1
      %s30 = ssub.s32 %s24, 2
      %s31 = sadd.s32 %s24, 1
      %s32 = ssub.s32 %s24, %s31
      %p33 = scmp.eq.s32.totalorder %s32, 0
      %s35 = sadd.s32 %s34, 1
      %s36 = scalar_select %p33, %s34, %s35
      %p39 = pneg %p33
      %p40 = scmp.eq.s32.totalorder %s24, 1
      %p41 = por %p39, %p40
      %p42 = scmp.ne.s32.totalorder %s34, %s37
      %p43 = scmp.eq.s32.totalorder %s24, 0
      %p44 = por %p42, %p43
      %p45 = scmp.ne.s32.totalorder %s34, %s37
      %p46 = scmp.eq.s32.totalorder %s29, 1
      %p47 = por %p45, %p46
      %p48 = scmp.ne.s32.totalorder %s37, %s38
      %p49 = scmp.eq.s32.totalorder %s29, 0
      %p50 = por %p48, %p49
      %p51 = scmp.ne.s32.totalorder %s37, %s38
      %p52 = scmp.eq.s32.totalorder %s30, 1
      %p53 = por %p51, %p52
      %p55 = scmp.ne.s32.totalorder %s38, %s54
      %p56 = scmp.eq.s32.totalorder %s30, 0
      %p57 = por %p55, %p56
      %s59 = sadd.s32 %s58, 1
      %p62 = scmp.eq.s32.totalorder %s24, 1
      %p63 = scmp.ne.s32.totalorder %s58, %s60
      %p64 = scmp.eq.s32.totalorder %s24, 0
      %p65 = por %p63, %p64
      %p66 = scmp.ne.s32.totalorder %s58, %s60
      %p67 = scmp.eq.s32.totalorder %s29, 1
      %p68 = por %p66, %p67
      %p69 = scmp.ne.s32.totalorder %s60, %s61
      %p70 = scmp.eq.s32.totalorder %s29, 0
      %p71 = por %p69, %p70
      %p72 = scmp.ne.s32.totalorder %s60, %s61
      %p73 = scmp.eq.s32.totalorder %s30, 1
      %p74 = por %p72, %p73
      %p76 = scmp.ne.s32.totalorder %s61, %s75
      %p77 = scmp.eq.s32.totalorder %s30, 0
      %p78 = por %p76, %p77
      %s80 = sadd.s32 %s79, 1
      %p83 = scmp.eq.s32.totalorder %s24, 1
      %p84 = scmp.ne.s32.totalorder %s79, %s81
      %p85 = scmp.eq.s32.totalorder %s24, 0
      %p86 = por %p84, %p85
      %p87 = scmp.ne.s32.totalorder %s79, %s81
      %p88 = scmp.eq.s32.totalorder %s29, 1
      %p89 = por %p87, %p88
      %p90 = scmp.ne.s32.totalorder %s81, %s82
      %p91 = scmp.eq.s32.totalorder %s29, 0
      %p92 = por %p90, %p91
      %p93 = scmp.ne.s32.totalorder %s81, %s82
      %p94 = scmp.eq.s32.totalorder %s30, 1
      %p95 = por %p93, %p94
      %p97 = scmp.ne.s32.totalorder %s82, %s96
      %p98 = scmp.eq.s32.totalorder %s30, 0
      %p99 = por %p97, %p98
      %s101 = sadd.s32 %s100, 1
      %p104 = scmp.eq.s32.totalorder %s24, 1
      %p105 = scmp.ne.s32.totalorder %s100, %s102
      %p106 = scmp.eq.s32.totalorder %s24, 0
      %p107 = por %p105, %p106
      %p108 = scmp.ne.s32.totalorder %s100, %s102
      %p109 = scmp.eq.s32.totalorder %s29, 1
      %p110 = por %p108, %p109
      %p111 = scmp.ne.s32.totalorder %s102, %s103
      %p112 = scmp.eq.s32.totalorder %s29, 0
      %p113 = por %p111, %p112
      %p114 = scmp.ne.s32.totalorder %s102, %s103
      %p115 = scmp.eq.s32.totalorder %s30, 1
      %p116 = por %p114, %p115
      %p118 = scmp.ne.s32.totalorder %s103, %s117
      %p119 = scmp.eq.s32.totalorder %s30, 0
      %p120 = por %p118, %p119
      %s122 = sadd.s32 %s121, 1
      %p125 = scmp.eq.s32.totalorder %s24, 1
      %p126 = scmp.ne.s32.totalorder %s121, %s123
      %p127 = scmp.eq.s32.totalorder %s24, 0
      %p128 = por %p126, %p127
      %p129 = scmp.ne.s32.totalorder %s121, %s123
      %p130 = scmp.eq.s32.totalorder %s29, 1
      %p131 = por %p129, %p130
      %p132 = scmp.ne.s32.totalorder %s123, %s124
      %p133 = scmp.eq.s32.totalorder %s29, 0
      %p134 = por %p132, %p133
      %p135 = scmp.ne.s32.totalorder %s123, %s124
      %p136 = scmp.eq.s32.totalorder %s30, 1
      %p137 = por %p135, %p136
      %p139 = scmp.ne.s32.totalorder %s124, %s138
      %p140 = scmp.eq.s32.totalorder %s30, 0
      %p141 = por %p139, %p140
      %s143 = sadd.s32 %s142, 1
      %p146 = scmp.eq.s32.totalorder %s24, 1
      %p147 = scmp.ne.s32.totalorder %s142, %s144
      %p148 = scmp.eq.s32.totalorder %s24, 0
      %p149 = por %p147, %p148
      %p150 = scmp.ne.s32.totalorder %s142, %s144
      %p151 = scmp.eq.s32.totalorder %s29, 1
      %p152 = por %p150, %p151
      %p153 = scmp.ne.s32.totalorder %s144, %s145
      %p154 = scmp.eq.s32.totalorder %s29, 0
      %p155 = por %p153, %p154
      %p156 = scmp.ne.s32.totalorder %s144, %s145
      %p157 = scmp.eq.s32.totalorder %s30, 1
      %p158 = por %p156, %p157
      %p160 = scmp.ne.s32.totalorder %s145, %s159
      %p161 = scmp.eq.s32.totalorder %s30, 0
      %p162 = por %p160, %p161
      %s164 = sadd.s32 %s163, 1
      %p167 = scmp.eq.s32.totalorder %s24, 1
      %p168 = scmp.ne.s32.totalorder %s163, %s165
      %p169 = scmp.eq.s32.totalorder %s24, 0
      %p170 = por %p168, %p169
      %p171 = scmp.ne.s32.totalorder %s163, %s165
      %p172 = scmp.eq.s32.totalorder %s29, 1
      %p173 = por %p171, %p172
      %p174 = scmp.ne.s32.totalorder %s165, %s166
      %p175 = scmp.eq.s32.totalorder %s29, 0
      %p176 = por %p174, %p175
      %p177 = scmp.ne.s32.totalorder %s165, %s166
      %p178 = scmp.eq.s32.totalorder %s30, 1
      %p179 = por %p177, %p178
      %p181 = scmp.ne.s32.totalorder %s166, %s180
      %p182 = scmp.eq.s32.totalorder %s30, 0
      %p183 = por %p181, %p182
      %s185 = sadd.s32 %s184, 1
      %p188 = scmp.eq.s32.totalorder %s24, 1
      %p189 = scmp.ne.s32.totalorder %s184, %s186
      %p190 = scmp.eq.s32.totalorder %s24, 0
      %p191 = por %p189, %p190
      %p192 = scmp.ne.s32.totalorder %s184, %s186
      %p193 = scmp.eq.s32.totalorder %s29, 1
      %p194 = por %p192, %p193
      %p195 = scmp.ne.s32.totalorder %s186, %s187
      %p196 = scmp.eq.s32.totalorder %s29, 0
      %p197 = por %p195, %p196
      %p198 = scmp.ne.s32.totalorder %s186, %s187
      %p199 = scmp.eq.s32.totalorder %s30, 1
      %p200 = por %p198, %p199
      %p202 = scmp.ne.s32.totalorder %s187, %s201
      %p203 = scmp.eq.s32.totalorder %s30, 0
      %p204 = por %p202, %p203
      %s206 = sadd.s32 %s205, 1
      %p209 = scmp.eq.s32.totalorder %s24, 1
      %p210 = scmp.ne.s32.totalorder %s205, %s207
      %p211 = scmp.eq.s32.totalorder %s24, 0
      %p212 = por %p210, %p211
      %p213 = scmp.ne.s32.totalorder %s205, %s207
      %p214 = scmp.eq.s32.totalorder %s29, 1
      %p215 = por %p213, %p214
      %p216 = scmp.ne.s32.totalorder %s207, %s208
      %p217 = scmp.eq.s32.totalorder %s29, 0
      %p218 = por %p216, %p217
      %p219 = scmp.ne.s32.totalorder %s207, %s208
      %p220 = scmp.eq.s32.totalorder %s30, 1
      %p221 = por %p219, %p220
      %p223 = scmp.ne.s32.totalorder %s208, %s222
      %p224 = scmp.eq.s32.totalorder %s30, 0
      %p225 = por %p223, %p224
      %s227 = sadd.s32 %s226, 1
      %p230 = scmp.eq.s32.totalorder %s24, 1
      %p231 = scmp.ne.s32.totalorder %s226, %s228
      %p232 = scmp.eq.s32.totalorder %s24, 0
      %p233 = por %p231, %p232
      %p234 = scmp.ne.s32.totalorder %s226, %s228
      %p235 = scmp.eq.s32.totalorder %s29, 1
      %p236 = por %p234, %p235
      %p237 = scmp.ne.s32.totalorder %s228, %s229
      %p238 = scmp.eq.s32.totalorder %s29, 0
      %p239 = por %p237, %p238
      %p240 = scmp.ne.s32.totalorder %s228, %s229
      %p241 = scmp.eq.s32.totalorder %s30, 1
      %p242 = por %p240, %p241
      %p244 = scmp.ne.s32.totalorder %s229, %s243
      %p245 = scmp.eq.s32.totalorder %s30, 0
      %p246 = por %p244, %p245
      %s247 = ssub.s32 %s24, %s31
      %p248 = scmp.eq.s32.totalorder %s247, 0
      %s250 = sadd.s32 %s249, 1
      %s251 = scalar_select %p248, %s249, %s250
      %p254 = pneg %p248
      %p255 = scmp.eq.s32.totalorder %s24, 1
      %p256 = por %p254, %p255
      %p257 = scmp.ne.s32.totalorder %s249, %s252
      %p258 = scmp.eq.s32.totalorder %s24, 0
      %p259 = por %p257, %p258
      %p260 = scmp.ne.s32.totalorder %s249, %s252
      %p261 = scmp.eq.s32.totalorder %s29, 1
      %p262 = por %p260, %p261
      %p263 = scmp.ne.s32.totalorder %s252, %s253
      %p264 = scmp.eq.s32.totalorder %s29, 0
      %p265 = por %p263, %p264
      %p266 = scmp.ne.s32.totalorder %s252, %s253
      %p267 = scmp.eq.s32.totalorder %s30, 1
      %p268 = por %p266, %p267
      %p270 = scmp.ne.s32.totalorder %s253, %s269
      %p271 = scmp.eq.s32.totalorder %s30, 0
      %p272 = por %p270, %p271
      %s273 = ssub.s32 %s24, %s31
      %p274 = scmp.eq.s32.totalorder %s273, 0
      %s276 = sadd.s32 %s275, 1
      %s277 = scalar_select %p274, %s275, %s276
      %p280 = pneg %p274
      %p281 = scmp.eq.s32.totalorder %s24, 1
      %p282 = por %p280, %p281
      %p283 = scmp.ne.s32.totalorder %s275, %s278
      %p284 = scmp.eq.s32.totalorder %s24, 0
      %p285 = por %p283, %p284
      %p286 = scmp.ne.s32.totalorder %s275, %s278
      %p287 = scmp.eq.s32.totalorder %s29, 1
      %p288 = por %p286, %p287
      %p289 = scmp.ne.s32.totalorder %s278, %s279
      %p290 = scmp.eq.s32.totalorder %s29, 0
      %p291 = por %p289, %p290
      %p292 = scmp.ne.s32.totalorder %s278, %s279
      %p293 = scmp.eq.s32.totalorder %s30, 1
      %p294 = por %p292, %p293
      %p296 = scmp.ne.s32.totalorder %s279, %s295
      %p297 = scmp.eq.s32.totalorder %s30, 0
      %p298 = por %p296, %p297
      %p299 = scmp.le.s32.totalorder 1, %s24
      %p300 = scmp.lt.s32.totalorder %s24, 3
      %p301 = pnand %p299, %p300
      %p302 = pneg %p301
      // Predicated region
      $region9: #{tpu_custom_call.1} parent=5 // pred_check
        _
      $region10: #{tpu_custom_call.1} parent=5 // pred_check_branch
        %304 = sbr.rel (%p301) target = $region12
      $region11: #{tpu_custom_call.1} parent=5 // pred_region
        %s305 = ssub.s32 %s24, 1
        // Predicated region
        $region13: #{tpu_custom_call.1} parent=11 // pred_check
          %p306 = pneg %p71
        $region14: #{tpu_custom_call.1} parent=11 // pred_check_branch
          %308 = sbr.rel (%p306) target = $region16
        $region15: #{tpu_custom_call.1} parent=11 // pred_region
          _
        $region16: #{tpu_custom_call.1} parent=11 // pred_fallthru
          _
        // Predicated region
        $region17: #{tpu_custom_call.1} parent=11 // pred_check
          %p309 = pneg %p92
        $region18: #{tpu_custom_call.1} parent=11 // pred_check_branch
          %311 = sbr.rel (%p309) target = $region20
        $region19: #{tpu_custom_call.1} parent=11 // pred_region
          _
        $region20: #{tpu_custom_call.1} parent=11 // pred_fallthru
          _
        // Predicated region
        $region21: #{tpu_custom_call.1} parent=11 // pred_check
          %p312 = pneg %p113
        $region22: #{tpu_custom_call.1} parent=11 // pred_check_branch
          %314 = sbr.rel (%p312) target = $region24
        $region23: #{tpu_custom_call.1} parent=11 // pred_region
          _
        $region24: #{tpu_custom_call.1} parent=11 // pred_fallthru
          _
        // Predicated region
        $region25: #{tpu_custom_call.1} parent=11 // pred_check
          %p315 = pneg %p134
        $region26: #{tpu_custom_call.1} parent=11 // pred_check_branch
          %317 = sbr.rel (%p315) target = $region28
        $region27: #{tpu_custom_call.1} parent=11 // pred_region
          _
        $region28: #{tpu_custom_call.1} parent=11 // pred_fallthru
          _
        // Predicated region
        $region29: #{tpu_custom_call.1} parent=11 // pred_check
          %p318 = pneg %p155
        $region30: #{tpu_custom_call.1} parent=11 // pred_check_branch
          %320 = sbr.rel (%p318) target = $region32
        $region31: #{tpu_custom_call.1} parent=11 // pred_region
          _
        $region32: #{tpu_custom_call.1} parent=11 // pred_fallthru
          _
        // Predicated region
        $region33: #{tpu_custom_call.1} parent=11 // pred_check
          %p321 = pneg %p176
        $region34: #{tpu_custom_call.1} parent=11 // pred_check_branch
          %323 = sbr.rel (%p321) target = $region36
        $region35: #{tpu_custom_call.1} parent=11 // pred_region
          _
        $region36: #{tpu_custom_call.1} parent=11 // pred_fallthru
          _
        // Predicated region
        $region37: #{tpu_custom_call.1} parent=11 // pred_check
          %p324 = pneg %p197
        $region38: #{tpu_custom_call.1} parent=11 // pred_check_branch
          %326 = sbr.rel (%p324) target = $region40
        $region39: #{tpu_custom_call.1} parent=11 // pred_region
          _
        $region40: #{tpu_custom_call.1} parent=11 // pred_fallthru
          _
        // Predicated region
        $region41: #{tpu_custom_call.1} parent=11 // pred_check
          %p327 = pneg %p218
        $region42: #{tpu_custom_call.1} parent=11 // pred_check_branch
          %329 = sbr.rel (%p327) target = $region44
        $region43: #{tpu_custom_call.1} parent=11 // pred_region
          _
        $region44: #{tpu_custom_call.1} parent=11 // pred_fallthru
          _
        // Predicated region
        $region45: #{tpu_custom_call.1} parent=11 // pred_check
          %p330 = pneg %p239
        $region46: #{tpu_custom_call.1} parent=11 // pred_check_branch
          %332 = sbr.rel (%p330) target = $region48
        $region47: #{tpu_custom_call.1} parent=11 // pred_region
          _
        $region48: #{tpu_custom_call.1} parent=11 // pred_fallthru
          _
      $region12: #{tpu_custom_call.1} parent=5 // pred_fallthru
        _
      %p333 = scmp.lt.s32.totalorder %s24, 2
      // Predicated region
      $region49: #{tpu_custom_call.1} parent=5 // pred_check
        %p334 = pneg %p333
      $region50: #{tpu_custom_call.1} parent=5 // pred_check_branch
        %336 = sbr.rel (%p334) target = $region52
      $region51: #{tpu_custom_call.1} parent=5 // pred_region
        // Predicated region
        $region53: #{tpu_custom_call.1} parent=51 // pred_check
          %p337 = pneg %p44
        $region54: #{tpu_custom_call.1} parent=51 // pred_check_branch
          %339 = sbr.rel (%p337) target = $region56
        $region55: #{tpu_custom_call.1} parent=51 // pred_region
          %p340 = scmp.lt.s32.totalorder %s24, 1
          %s341 = scalar_select %p340, %s24, 1
          %s342 = smul.addr %s341, 16
          %s343 = smul.addr %s342, 8
          %s344 = scalar_lea.vmem %s0, %s343
        $region56: #{tpu_custom_call.1} parent=51 // pred_fallthru
          _
      $region52: #{tpu_custom_call.1} parent=5 // pred_fallthru
        _
      %p345 = scmp.le.s32.totalorder 1, %s24
      %p346 = scmp.lt.s32.totalorder %s24, 3
      %p347 = pnand %p345, %p346
      %p348 = pneg %p347
      // Predicated region
      $region57: #{tpu_custom_call.1} parent=5 // pred_check
        _
      $region58: #{tpu_custom_call.1} parent=5 // pred_check_branch
        %350 = sbr.rel (%p347) target = $region60
      $region59: #{tpu_custom_call.1} parent=5 // pred_region
        %s351 = ssub.s32 %s24, 1
        %p352 = scmp.lt.s32.totalorder %s29, 1
        %s353 = scalar_select %p352, %s29, 1
        %s354 = smul.addr %s353, 16
        %s355 = smul.addr %s354, 8
        %s356 = scalar_lea.vmem %s0, %s355
        %p357 = pneg %p50
        %p358 = pneg %p47
        %p359 = pneg %p71
        %p360 = pneg %p68
        %p361 = pneg %p92
        %p362 = pneg %p89
        %p363 = pneg %p113
        %p364 = pneg %p110
        %p365 = pneg %p134
        %p366 = pneg %p131
        %p367 = pneg %p155
        %p368 = pneg %p152
        %p369 = pneg %p176
        %p370 = pneg %p173
        %p371 = pneg %p197
        %p372 = pneg %p194
        %p373 = pneg %p218
        %p374 = pneg %p215
        %p375 = pneg %p239
        %p376 = pneg %p236
        %p377 = pneg %p265
        %p378 = pneg %p262
        %s379 = sand.u32 %s252, 1
        %s380 = scalar_lea.sflag [#allocation3], %s379
        %s381 = sand.u32 %s252, 1
        %s382 = smul.addr %s381, 128
        %s383 = scalar_lea.vmem [#allocation2], %s382
        %p384 = pneg %p291
        %p385 = pneg %p288
        %s386 = sand.u32 %s278, 1
        %s387 = scalar_lea.sflag [#allocation5], %s386
        %s388 = sand.u32 %s278, 1
        %s389 = scalar_lea.vmem [#allocation4], %s388
        %p390 = scmp.lt.s32.totalorder %s29, 1
        %s391 = scalar_select %p390, %s29, 1
        %s392 = smul.addr %s391, 16
        %s393 = smul.addr %s392, 8
        %s394 = scalar_lea.vmem %s0, %s393
        %v396 = vld [vmem:[%s1] sm:$0xff]
        %v397 = vld [vmem:[%s1 + $0x8] sm:$0xff]
        %v398 = vld [vmem:[%s1 + $0x10] sm:$0xff]
        %v399 = vld [vmem:[%s1 + $0x18] sm:$0xff]
        %v400 = vld [vmem:[%s1 + $0x20] sm:$0xff]
        %v401 = vld [vmem:[%s1 + $0x28] sm:$0xff]
        %v402 = vld [vmem:[%s1 + $0x30] sm:$0xff]
        %v403 = vld [vmem:[%s1 + $0x38] sm:$0xff]
        %v404 = vld [vmem:[%s1 + $0x40] sm:$0xff]
        %v405 = vld [vmem:[%s1 + $0x48] sm:$0xff]
        %v406 = vld [vmem:[%s1 + $0x50] sm:$0xff]
        %v407 = vld [vmem:[%s1 + $0x58] sm:$0xff]
        %v408 = vld [vmem:[%s1 + $0x60] sm:$0xff]
        %v409 = vld [vmem:[%s1 + $0x68] sm:$0xff]
        %v410 = vld [vmem:[%s1 + $0x70] sm:$0xff]
        %v411 = vld [vmem:[%s1 + $0x78] sm:$0xff]
        %v412 = vld [vmem:[%s2] sm:$0xff]
        %v413 = vld [vmem:[%s2 + $0x8] sm:$0xff]
        %v414 = vld [vmem:[%s2 + $0x10] sm:$0xff]
        %v415 = vld [vmem:[%s2 + $0x18] sm:$0xff]
        %v416 = vld [vmem:[%s3] sm:$0xff]
        %v417 = vld [vmem:[%s3 + $0x8] sm:$0xff]
        %v418 = vld [vmem:[%s3 + $0x10] sm:$0xff]
        %v419 = vld [vmem:[%s3 + $0x18] sm:$0xff]
        %v420 = vld [vmem:[%s3 + $0x20] sm:$0xff]
        %v421 = vld [vmem:[%s3 + $0x28] sm:$0xff]
        %v422 = vld [vmem:[%s3 + $0x30] sm:$0xff]
        %v423 = vld [vmem:[%s3 + $0x38] sm:$0xff]
        %v424 = vld [vmem:[%s3 + $0x40] sm:$0xff]
        %v425 = vld [vmem:[%s3 + $0x48] sm:$0xff]
        %v426 = vld [vmem:[%s3 + $0x50] sm:$0xff]
        %v427 = vld [vmem:[%s3 + $0x58] sm:$0xff]
        %v428 = vld [vmem:[%s3 + $0x60] sm:$0xff]
        %v429 = vld [vmem:[%s3 + $0x68] sm:$0xff]
        %v430 = vld [vmem:[%s3 + $0x70] sm:$0xff]
        %v431 = vld [vmem:[%s3 + $0x78] sm:$0xff]
        %v432 = vld [vmem:[%s4] sm:$0xf]
        %v433 = vld [vmem:[%s4 + $0x4] sm:$0xf]
        %v434 = vld [vmem:[%s4 + $0x8] sm:$0xf]
        %v435 = vld [vmem:[%s4 + $0xc] sm:$0xf]
        %v436 = vld [vmem:[%s4 + $0x10] sm:$0xf]
        %v437 = vld [vmem:[%s4 + $0x14] sm:$0xf]
        %v438 = vld [vmem:[%s4 + $0x18] sm:$0xf]
        %v439 = vld [vmem:[%s4 + $0x1c] sm:$0xf]
        %v440 = vld [vmem:[%s5] sm:$0xff]
        %v441 = vld [vmem:[%s5 + $0x8] sm:$0xff]
        %v442 = vld [vmem:[%s5 + $0x10] sm:$0xff]
        %v443 = vld [vmem:[%s5 + $0x18] sm:$0xff]
        %v444 = vld [vmem:[%s5 + $0x20] sm:$0xff]
        %v445 = vld [vmem:[%s5 + $0x28] sm:$0xff]
        %v446 = vld [vmem:[%s5 + $0x30] sm:$0xff]
        %v447 = vld [vmem:[%s5 + $0x38] sm:$0xff]
        %v448 = vld [vmem:[%s6] sm:$0xf]
        %v449 = vld [vmem:[%s6 + $0x4] sm:$0xf]
        %v450 = vld [vmem:[%s6 + $0x8] sm:$0xf]
        %v451 = vld [vmem:[%s6 + $0xc] sm:$0xf]
        %v452 = vld [vmem:[%s6 + $0x10] sm:$0xf]
        %v453 = vld [vmem:[%s6 + $0x14] sm:$0xf]
        %v454 = vld [vmem:[%s6 + $0x18] sm:$0xf]
        %v455 = vld [vmem:[%s6 + $0x1c] sm:$0xf]
        %v456 = vld [vmem:[%s6 + $0x20] sm:$0xf]
        %v457 = vld [vmem:[%s6 + $0x24] sm:$0xf]
        %v458 = vld [vmem:[%s6 + $0x28] sm:$0xf]
        %v459 = vld [vmem:[%s6 + $0x2c] sm:$0xf]
        %v460 = vld [vmem:[%s6 + $0x30] sm:$0xf]
        %v461 = vld [vmem:[%s6 + $0x34] sm:$0xf]
        %v462 = vld [vmem:[%s6 + $0x38] sm:$0xf]
        %v463 = vld [vmem:[%s6 + $0x3c] sm:$0xf]
        %v464 = vld [vmem:[%s6 + $0x40] sm:$0xf]
        %v465 = vld [vmem:[%s6 + $0x44] sm:$0xf]
        %v466 = vld [vmem:[%s6 + $0x48] sm:$0xf]
        %v467 = vld [vmem:[%s6 + $0x4c] sm:$0xf]
        %v468 = vld [vmem:[%s6 + $0x50] sm:$0xf]
        %v469 = vld [vmem:[%s6 + $0x54] sm:$0xf]
        %v470 = vld [vmem:[%s6 + $0x58] sm:$0xf]
        %v471 = vld [vmem:[%s6 + $0x5c] sm:$0xf]
        %v472 = vld [vmem:[%s6 + $0x60] sm:$0xf]
        %v473 = vld [vmem:[%s6 + $0x64] sm:$0xf]
        %v474 = vld [vmem:[%s6 + $0x68] sm:$0xf]
        %v475 = vld [vmem:[%s6 + $0x6c] sm:$0xf]
        %v476 = vld [vmem:[%s6 + $0x70] sm:$0xf]
        %v477 = vld [vmem:[%s6 + $0x74] sm:$0xf]
        %v478 = vld [vmem:[%s6 + $0x78] sm:$0xf]
        %v479 = vld [vmem:[%s6 + $0x7c] sm:$0xf]
        %v480 = vld [vmem:[%s7] sm:$0xff]
        %v481 = vld [vmem:[%s7 + $0x8] sm:$0xff]
        %v482 = vld [vmem:[%s7 + $0x10] sm:$0xff]
        %v483 = vld [vmem:[%s7 + $0x18] sm:$0xff]
        %v484 = vld [vmem:[%s7 + $0x20] sm:$0xff]
        %v485 = vld [vmem:[%s7 + $0x28] sm:$0xff]
        %v486 = vld [vmem:[%s7 + $0x30] sm:$0xff]
        %v487 = vld [vmem:[%s7 + $0x38] sm:$0xff]
        %v488 = vld [vmem:[%s8] sm:$0xf]
        %v489 = vld [vmem:[%s8 + $0x4] sm:$0xf]
        %v490 = vld [vmem:[%s8 + $0x8] sm:$0xf]
        %v491 = vld [vmem:[%s8 + $0xc] sm:$0xf]
        %v492 = vld [vmem:[%s8 + $0x10] sm:$0xf]
        %v493 = vld [vmem:[%s8 + $0x14] sm:$0xf]
        %v494 = vld [vmem:[%s8 + $0x18] sm:$0xf]
        %v495 = vld [vmem:[%s8 + $0x1c] sm:$0xf]
        %v496 = vld [vmem:[%s8 + $0x20] sm:$0xf]
        %v497 = vld [vmem:[%s8 + $0x24] sm:$0xf]
        %v498 = vld [vmem:[%s8 + $0x28] sm:$0xf]
        %v499 = vld [vmem:[%s8 + $0x2c] sm:$0xf]
        %v500 = vld [vmem:[%s8 + $0x30] sm:$0xf]
        %v501 = vld [vmem:[%s8 + $0x34] sm:$0xf]
        %v502 = vld [vmem:[%s8 + $0x38] sm:$0xf]
        %v503 = vld [vmem:[%s8 + $0x3c] sm:$0xf]
        %v504 = vld [vmem:[%s9] sm:$0xff]
        %v505 = vld [vmem:[%s9 + $0x8] sm:$0xff]
        %v506 = vld [vmem:[%s9 + $0x10] sm:$0xff]
        %v507 = vld [vmem:[%s9 + $0x18] sm:$0xff]
        %v508 = vld [vmem:[%s9 + $0x20] sm:$0xff]
        %v509 = vld [vmem:[%s9 + $0x28] sm:$0xff]
        %v510 = vld [vmem:[%s9 + $0x30] sm:$0xff]
        %v511 = vld [vmem:[%s9 + $0x38] sm:$0xff]
        %v512 = vld [vmem:[%s9 + $0x40] sm:$0xff]
        %v513 = vld [vmem:[%s9 + $0x48] sm:$0xff]
        %v514 = vld [vmem:[%s9 + $0x50] sm:$0xff]
        %v515 = vld [vmem:[%s9 + $0x58] sm:$0xff]
        %v516 = vld [vmem:[%s9 + $0x60] sm:$0xff]
        %v517 = vld [vmem:[%s9 + $0x68] sm:$0xff]
        %v518 = vld [vmem:[%s9 + $0x70] sm:$0xff]
        %v519 = vld [vmem:[%s9 + $0x78] sm:$0xff]
        %v520 = vld [vmem:[%s394] sm:$0xff]
        %v521 = vld [vmem:[%s394 + $0x8] sm:$0xff]
        %v522 = vld [vmem:[%s394 + $0x10] sm:$0xff]
        %v523 = vld [vmem:[%s394 + $0x18] sm:$0xff]
        %v524 = vld [vmem:[%s394 + $0x20] sm:$0xff]
        %v525 = vld [vmem:[%s394 + $0x28] sm:$0xff]
        %v526 = vld [vmem:[%s394 + $0x30] sm:$0xff]
        %v527 = vld [vmem:[%s394 + $0x38] sm:$0xff]
        %v528 = vld [vmem:[%s394 + $0x40] sm:$0xff]
        %v529 = vld [vmem:[%s394 + $0x48] sm:$0xff]
        %v530 = vld [vmem:[%s394 + $0x50] sm:$0xff]
        %v531 = vld [vmem:[%s394 + $0x58] sm:$0xff]
        %v532 = vld [vmem:[%s394 + $0x60] sm:$0xff]
        %v533 = vld [vmem:[%s394 + $0x68] sm:$0xff]
        %v534 = vld [vmem:[%s394 + $0x70] sm:$0xff]
        %v535 = vld [vmem:[%s394 + $0x78] sm:$0xff]
        %536 = vadd.xlane.f32.xlu0 %v520
        %v537 = vpop.xlane.xlu0 %536
        %538 = vadd.xlane.f32.xlu0 %v521
        %v539 = vpop.xlane.xlu0 %538
        %540 = vadd.xlane.f32.xlu0 %v522
        %v541 = vpop.xlane.xlu0 %540
        %542 = vadd.xlane.f32.xlu0 %v523
        %v543 = vpop.xlane.xlu0 %542
        %544 = vadd.xlane.f32.xlu0 %v524
        %v545 = vpop.xlane.xlu0 %544
        %546 = vadd.xlane.f32.xlu0 %v525
        %v547 = vpop.xlane.xlu0 %546
        %548 = vadd.xlane.f32.xlu0 %v526
        %v549 = vpop.xlane.xlu0 %548
        %550 = vadd.xlane.f32.xlu0 %v527
        %v551 = vpop.xlane.xlu0 %550
        %552 = vadd.xlane.f32.xlu0 %v528
        %v553 = vpop.xlane.xlu0 %552
        %554 = vadd.xlane.f32.xlu0 %v529
        %v555 = vpop.xlane.xlu0 %554
        %556 = vadd.xlane.f32.xlu0 %v530
        %v557 = vpop.xlane.xlu0 %556
        %558 = vadd.xlane.f32.xlu0 %v531
        %v559 = vpop.xlane.xlu0 %558
        %560 = vadd.xlane.f32.xlu0 %v532
        %v561 = vpop.xlane.xlu0 %560
        %562 = vadd.xlane.f32.xlu0 %v533
        %v563 = vpop.xlane.xlu0 %562
        %564 = vadd.xlane.f32.xlu0 %v534
        %v565 = vpop.xlane.xlu0 %564
        %566 = vadd.xlane.f32.xlu0 %v535
        %v567 = vpop.xlane.xlu0 %566
        %v568 = vmul.f32 %v520, %v520
        %v569 = vmul.f32 %v521, %v521
        %v570 = vmul.f32 %v522, %v522
        %v571 = vmul.f32 %v523, %v523
        %v572 = vmul.f32 %v524, %v524
        %v573 = vmul.f32 %v525, %v525
        %v574 = vmul.f32 %v526, %v526
        %v575 = vmul.f32 %v527, %v527
        %v576 = vmul.f32 %v528, %v528
        %v577 = vmul.f32 %v529, %v529
        %v578 = vmul.f32 %v530, %v530
        %v579 = vmul.f32 %v531, %v531
        %v580 = vmul.f32 %v532, %v532
        %v581 = vmul.f32 %v533, %v533
        %v582 = vmul.f32 %v534, %v534
        %v583 = vmul.f32 %v535, %v535
        %584 = vadd.xlane.f32.xlu0 %v568
        %v585 = vpop.xlane.xlu0 %584
        %586 = vadd.xlane.f32.xlu0 %v569
        %v587 = vpop.xlane.xlu0 %586
        %588 = vadd.xlane.f32.xlu0 %v570
        %v589 = vpop.xlane.xlu0 %588
        %590 = vadd.xlane.f32.xlu0 %v571
        %v591 = vpop.xlane.xlu0 %590
        %592 = vadd.xlane.f32.xlu0 %v572
        %v593 = vpop.xlane.xlu0 %592
        %594 = vadd.xlane.f32.xlu0 %v573
        %v595 = vpop.xlane.xlu0 %594
        %596 = vadd.xlane.f32.xlu0 %v574
        %v597 = vpop.xlane.xlu0 %596
        %598 = vadd.xlane.f32.xlu0 %v575
        %v599 = vpop.xlane.xlu0 %598
        %600 = vadd.xlane.f32.xlu0 %v576
        %v601 = vpop.xlane.xlu0 %600
        %602 = vadd.xlane.f32.xlu0 %v577
        %v603 = vpop.xlane.xlu0 %602
        %604 = vadd.xlane.f32.xlu0 %v578
        %v605 = vpop.xlane.xlu0 %604
        %606 = vadd.xlane.f32.xlu0 %v579
        %v607 = vpop.xlane.xlu0 %606
        %608 = vadd.xlane.f32.xlu0 %v580
        %v609 = vpop.xlane.xlu0 %608
        %610 = vadd.xlane.f32.xlu0 %v581
        %v611 = vpop.xlane.xlu0 %610
        %612 = vadd.xlane.f32.xlu0 %v582
        %v613 = vpop.xlane.xlu0 %612
        %614 = vadd.xlane.f32.xlu0 %v583
        %v615 = vpop.xlane.xlu0 %614
        %616 = vmatprep.subr.mxu0 0.0
        %617 = vmatpush1.msra.mxu0 %v537
        %618 = vmatprep.subr.mxu0 0.0
        %619 = vmatpush1.msra.mxu0 %v539
        %620 = vmatprep.subr.mxu0 0.0
        %621 = vmatpush1.msra.mxu0 %v541
        %622 = vmatprep.subr.mxu0 0.0
        %623 = vmatpush1.msra.mxu0 %v543
        %624 = vmatprep.subr.mxu0 0.0
        %625 = vmatpush1.msra.mxu0 %v545
        %626 = vmatprep.subr.mxu0 0.0
        %627 = vmatpush1.msra.mxu0 %v547
        %628 = vmatprep.subr.mxu0 0.0
        %629 = vmatpush1.msra.mxu0 %v549
        %630 = vmatprep.subr.mxu0 0.0
        %631 = vmatpush1.msra.mxu0 %v551
        %632 = vmatprep.subr.mxu0 0.0
        %633 = vmatpush1.msra.mxu0 %v553
        %634 = vmatprep.subr.mxu0 0.0
        %635 = vmatpush1.msra.mxu0 %v555
        %636 = vmatprep.subr.mxu0 0.0
        %637 = vmatpush1.msra.mxu0 %v557
        %638 = vmatprep.subr.mxu0 0.0
        %639 = vmatpush1.msra.mxu0 %v559
        %640 = vmatprep.subr.mxu0 0.0
        %641 = vmatpush1.msra.mxu0 %v561
        %642 = vmatprep.subr.mxu0 0.0
        %643 = vmatpush1.msra.mxu0 %v563
        %644 = vmatprep.subr.mxu0 0.0
        %645 = vmatpush1.msra.mxu0 %v565
        %646 = vmatprep.subr.mxu0 0.0
        %647 = vmatpush1.msra.mxu0 %v567
        %648 = vmatprep.subr.mxu0 0.0
        %649 = vmatpush1.msra.mxu0 0.0
        %650 = vmatprep.subr.mxu0 0.0
        %651 = vmatpush1.msra.mxu0 0.0
        %652 = vmatprep.subr.mxu0 0.0
        %653 = vmatpush1.msra.mxu0 0.0
        %654 = vmatprep.subr.mxu0 0.0
        %655 = vmatpush1.msra.mxu0 0.0
        %656 = vmatprep.subr.mxu0 0.0
        %657 = vmatpush1.msra.mxu0 0.0
        %658 = vmatprep.subr.mxu0 0.0
        %659 = vmatpush1.msra.mxu0 0.0
        %660 = vmatprep.subr.mxu0 0.0
        %661 = vmatpush1.msra.mxu0 0.0
        %662 = vmatprep.subr.mxu0 0.0
        %663 = vmatpush1.msra.mxu0 0.0
        %664 = vmatprep.subr.mxu0 0.0
        %665 = vmatpush1.msra.mxu0 0.0
        %666 = vmatprep.subr.mxu0 0.0
        %667 = vmatpush1.msra.mxu0 0.0
        %668 = vmatprep.subr.mxu0 0.0
        %669 = vmatpush1.msra.mxu0 0.0
        %670 = vmatprep.subr.mxu0 0.0
        %671 = vmatpush1.msra.mxu0 0.0
        %672 = vmatprep.subr.mxu0 0.0
        %673 = vmatpush1.msra.mxu0 0.0
        %674 = vmatprep.subr.mxu0 0.0
        %675 = vmatpush1.msra.mxu0 0.0
        %676 = vmatprep.subr.mxu0 0.0
        %677 = vmatpush1.msra.mxu0 0.0
        %678 = vmatprep.subr.mxu0 0.0
        %679 = vmatpush1.msra.mxu0 0.0
        %680 = vmatprep.mubr.f32.mxu0 0.0
        %681 = vmatmul.mubr.f32.gmra.mrb[0].mxu0 %v412
        %v682 = vpop.f32.mrb[0].mxu0
        %v683 = vadd.f32 0.0, %v682
        %v684 = vpop.f32.mrb[0].mxu0
        %685 = vmatprep.mubr.f32.mxu0 0.0
        %686 = vmatmul.mubr.f32.gmra.mrb[0].mxu0 %v413
        %v687 = vpop.f32.mrb[0].mxu0
        %v688 = vadd.f32 0.0, %v687
        %v689 = vpop.f32.mrb[0].mxu0
        %690 = vmatprep.mubr.f32.mxu0 0.0
        %691 = vmatmul.mubr.f32.gmra.mrb[0].mxu0 %v414
        %v692 = vpop.f32.mrb[0].mxu0
        %v693 = vadd.f32 0.0, %v692
        %v694 = vpop.f32.mrb[0].mxu0
        %695 = vmatprep.mubr.f32.mxu0 0.0
        %696 = vmatmul.mubr.f32.gmra.mrb[0].mxu0 %v415
        %v697 = vpop.f32.mrb[0].mxu0
        %v698 = vadd.f32 0.0, %v697
        %v699 = vpop.f32.mrb[0].mxu0
        %700 = vdwg.mxu0
        %v701 = vmul.f32 %v683, 0.00390625
        %v702 = vmul.f32 %v688, 0.00390625
        %v703 = vmul.f32 %v693, 0.00390625
        %v704 = vmul.f32 %v698, 0.00390625
        %705 = vmatprep.subr.mxu0 0.0
        %706 = vmatpush1.msra.mxu0 %v585
        %707 = vmatprep.subr.mxu0 0.0
        %708 = vmatpush1.msra.mxu0 %v587
        %709 = vmatprep.subr.mxu0 0.0
        %710 = vmatpush1.msra.mxu0 %v589
        %711 = vmatprep.subr.mxu0 0.0
        %712 = vmatpush1.msra.mxu0 %v591
        %713 = vmatprep.subr.mxu0 0.0
        %714 = vmatpush1.msra.mxu0 %v593
        %715 = vmatprep.subr.mxu0 0.0
        %716 = vmatpush1.msra.mxu0 %v595
        %717 = vmatprep.subr.mxu0 0.0
        %718 = vmatpush1.msra.mxu0 %v597
        %719 = vmatprep.subr.mxu0 0.0
        %720 = vmatpush1.msra.mxu0 %v599
        %721 = vmatprep.subr.mxu0 0.0
        %722 = vmatpush1.msra.mxu0 %v601
        %723 = vmatprep.subr.mxu0 0.0
        %724 = vmatpush1.msra.mxu0 %v603
        %725 = vmatprep.subr.mxu0 0.0
        %726 = vmatpush1.msra.mxu0 %v605
        %727 = vmatprep.subr.mxu0 0.0
        %728 = vmatpush1.msra.mxu0 %v607
        %729 = vmatprep.subr.mxu0 0.0
        %730 = vmatpush1.msra.mxu0 %v609
        %731 = vmatprep.subr.mxu0 0.0
        %732 = vmatpush1.msra.mxu0 %v611
        %733 = vmatprep.subr.mxu0 0.0
        %734 = vmatpush1.msra.mxu0 %v613
        %735 = vmatprep.subr.mxu0 0.0
        %736 = vmatpush1.msra.mxu0 %v615
        %737 = vmatprep.subr.mxu0 0.0
        %738 = vmatpush1.msra.mxu0 0.0
        %739 = vmatprep.subr.mxu0 0.0
        %740 = vmatpush1.msra.mxu0 0.0
        %741 = vmatprep.subr.mxu0 0.0
        %742 = vmatpush1.msra.mxu0 0.0
        %743 = vmatprep.subr.mxu0 0.0
        %744 = vmatpush1.msra.mxu0 0.0
        %745 = vmatprep.subr.mxu0 0.0
        %746 = vmatpush1.msra.mxu0 0.0
        %747 = vmatprep.subr.mxu0 0.0
        %748 = vmatpush1.msra.mxu0 0.0
        %749 = vmatprep.subr.mxu0 0.0
        %750 = vmatpush1.msra.mxu0 0.0
        %751 = vmatprep.subr.mxu0 0.0
        %752 = vmatpush1.msra.mxu0 0.0
        %753 = vmatprep.subr.mxu0 0.0
        %754 = vmatpush1.msra.mxu0 0.0
        %755 = vmatprep.subr.mxu0 0.0
        %756 = vmatpush1.msra.mxu0 0.0
        %757 = vmatprep.subr.mxu0 0.0
        %758 = vmatpush1.msra.mxu0 0.0
        %759 = vmatprep.subr.mxu0 0.0
        %760 = vmatpush1.msra.mxu0 0.0
        %761 = vmatprep.subr.mxu0 0.0
        %762 = vmatpush1.msra.mxu0 0.0
        %763 = vmatprep.subr.mxu0 0.0
        %764 = vmatpush1.msra.mxu0 0.0
        %765 = vmatprep.subr.mxu0 0.0
        %766 = vmatpush1.msra.mxu0 0.0
        %767 = vmatprep.subr.mxu0 0.0
        %768 = vmatpush1.msra.mxu0 0.0
        %769 = vmatprep.mubr.f32.mxu0 0.0
        %770 = vmatmul.mubr.f32.gmra.mrb[0].mxu0 %v412
        %v771 = vpop.f32.mrb[0].mxu0
        %v772 = vadd.f32 0.0, %v771
        %v773 = vpop.f32.mrb[0].mxu0
        %774 = vmatprep.mubr.f32.mxu0 0.0
        %775 = vmatmul.mubr.f32.gmra.mrb[0].mxu0 %v413
        %v776 = vpop.f32.mrb[0].mxu0
        %v777 = vadd.f32 0.0, %v776
        %v778 = vpop.f32.mrb[0].mxu0
        %779 = vmatprep.mubr.f32.mxu0 0.0
        %780 = vmatmul.mubr.f32.gmra.mrb[0].mxu0 %v414
        %v781 = vpop.f32.mrb[0].mxu0
        %v782 = vadd.f32 0.0, %v781
        %v783 = vpop.f32.mrb[0].mxu0
        %784 = vmatprep.mubr.f32.mxu0 0.0
        %785 = vmatmul.mubr.f32.gmra.mrb[0].mxu0 %v415
        %v786 = vpop.f32.mrb[0].mxu0
        %v787 = vadd.f32 0.0, %v786
        %v788 = vpop.f32.mrb[0].mxu0
        %789 = vdwg.mxu0
        %v790 = vmul.f32 %v772, 0.00390625
        %v791 = vmul.f32 %v777, 0.00390625
        %v792 = vmul.f32 %v782, 0.00390625
        %v793 = vmul.f32 %v787, 0.00390625
        %v794 = vmul.f32 %v701, %v701
        %v795 = vmul.f32 %v702, %v702
        %v796 = vmul.f32 %v703, %v703
        %v797 = vmul.f32 %v704, %v704
        %v798 = vsub.f32 %v790, %v794
        %v799 = vsub.f32 %v791, %v795
        %v800 = vsub.f32 %v792, %v796
        %v801 = vsub.f32 %v793, %v797
        %v802 = vmax.f32 %v798, 0.0
        %v803 = vmax.f32 %v799, 0.0
        %v804 = vmax.f32 %v800, 0.0
        %v805 = vmax.f32 %v801, 0.0
        %v806 = vadd.f32 %v802, 1e-06
        %v807 = vadd.f32 %v803, 1e-06
        %v808 = vadd.f32 %v804, 1e-06
        %v809 = vadd.f32 %v805, 1e-06
        %v810 = vrsqrt.pop %v806
        %v811 = vrsqrt.pop %v807
        %v812 = vrsqrt.pop %v808
        %v813 = vrsqrt.pop %v809
        %vm814 = vcmask 261120
        %v816 = vsel %vm814, %v396, 0
        %v819 = vsel %vm814, %v397, 0
        %v822 = vsel %vm814, %v398, 0
        %v825 = vsel %vm814, %v399, 0
        %v828 = vsel %vm814, %v400, 0
        %v831 = vsel %vm814, %v401, 0
        %v834 = vsel %vm814, %v402, 0
        %v837 = vsel %vm814, %v403, 0
        %v840 = vsel %vm814, %v404, 0
        %v843 = vsel %vm814, %v405, 0
        %v846 = vsel %vm814, %v406, 0
        %v849 = vsel %vm814, %v407, 0
        %v852 = vsel %vm814, %v408, 0
        %v855 = vsel %vm814, %v409, 0
        %v858 = vsel %vm814, %v410, 0
        %v861 = vsel %vm814, %v411, 0
        %863 = vmatprep.subr.mxu0 0.0
        %864 = vmatpush1.msra.mxu0 %v810
        %865 = vmatprep.subr.mxu0 0.0
        %866 = vmatpush1.msra.mxu0 %v811
        %867 = vmatprep.subr.mxu0 0.0
        %868 = vmatpush1.msra.mxu0 %v812
        %869 = vmatprep.subr.mxu0 0.0
        %870 = vmatpush1.msra.mxu0 %v813
        %871 = vmatprep.subr.mxu0 0.0
        %872 = vmatpush1.msra.mxu0 0.0
        %873 = vmatprep.subr.mxu0 0.0
        %874 = vmatpush1.msra.mxu0 0.0
        %875 = vmatprep.subr.mxu0 0.0
        %876 = vmatpush1.msra.mxu0 0.0
        %877 = vmatprep.subr.mxu0 0.0
        %878 = vmatpush1.msra.mxu0 0.0
        %879 = vmatprep.subr.mxu0 0.0
        %880 = vmatpush1.msra.mxu0 0.0
        %881 = vmatprep.subr.mxu0 0.0
        %882 = vmatpush1.msra.mxu0 0.0
        %883 = vmatprep.subr.mxu0 0.0
        %884 = vmatpush1.msra.mxu0 0.0
        %885 = vmatprep.subr.mxu0 0.0
        %886 = vmatpush1.msra.mxu0 0.0
        %887 = vmatprep.subr.mxu0 0.0
        %888 = vmatpush1.msra.mxu0 0.0
        %889 = vmatprep.subr.mxu0 0.0
        %890 = vmatpush1.msra.mxu0 0.0
        %891 = vmatprep.subr.mxu0 0.0
        %892 = vmatpush1.msra.mxu0 0.0
        %893 = vmatprep.subr.mxu0 0.0
        %894 = vmatpush1.msra.mxu0 0.0
        %895 = vmatprep.subr.mxu0 0.0
        %896 = vmatpush1.msra.mxu0 0.0
        %897 = vmatprep.subr.mxu0 0.0
        %898 = vmatpush1.msra.mxu0 0.0
        %899 = vmatprep.subr.mxu0 0.0
        %900 = vmatpush1.msra.mxu0 0.0
        %901 = vmatprep.subr.mxu0 0.0
        %902 = vmatpush1.msra.mxu0 0.0
        %903 = vmatprep.subr.mxu0 0.0
        %904 = vmatpush1.msra.mxu0 0.0
        %905 = vmatprep.subr.mxu0 0.0
        %906 = vmatpush1.msra.mxu0 0.0
        %907 = vmatprep.subr.mxu0 0.0
        %908 = vmatpush1.msra.mxu0 0.0
        %909 = vmatprep.subr.mxu0 0.0
        %910 = vmatpush1.msra.mxu0 0.0
        %911 = vmatprep.subr.mxu0 0.0
        %912 = vmatpush1.msra.mxu0 0.0
        %913 = vmatprep.subr.mxu0 0.0
        %914 = vmatpush1.msra.mxu0 0.0
        %915 = vmatprep.subr.mxu0 0.0
        %916 = vmatpush1.msra.mxu0 0.0
        %917 = vmatprep.subr.mxu0 0.0
        %918 = vmatpush1.msra.mxu0 0.0
        %919 = vmatprep.subr.mxu0 0.0
        %920 = vmatpush1.msra.mxu0 0.0
        %921 = vmatprep.subr.mxu0 0.0
        %922 = vmatpush1.msra.mxu0 0.0
        %923 = vmatprep.subr.mxu0 0.0
        %924 = vmatpush1.msra.mxu0 0.0
        %925 = vmatprep.subr.mxu0 0.0
        %926 = vmatpush1.msra.mxu0 0.0
        %927 = vmatprep.mubr.f32.mxu0 0.0
        %928 = vmatmul.mubr.f32.gmra.mrb[0].mxu0 %v816
        %v929 = vpop.f32.mrb[0].mxu0
        %v930 = vadd.f32 0.0, %v929
        %v931 = vpop.f32.mrb[0].mxu0
        %932 = vmatprep.mubr.f32.mxu0 0.0
        %933 = vmatmul.mubr.f32.gmra.mrb[0].mxu0 %v819
        %v934 = vpop.f32.mrb[0].mxu0
        %v935 = vadd.f32 0.0, %v934
        %v936 = vpop.f32.mrb[0].mxu0
        %937 = vmatprep.mubr.f32.mxu0 0.0
        %938 = vmatmul.mubr.f32.gmra.mrb[0].mxu0 %v822
        %v939 = vpop.f32.mrb[0].mxu0
        %v940 = vadd.f32 0.0, %v939
        %v941 = vpop.f32.mrb[0].mxu0
        %942 = vmatprep.mubr.f32.mxu0 0.0
        %943 = vmatmul.mubr.f32.gmra.mrb[0].mxu0 %v825
        %v944 = vpop.f32.mrb[0].mxu0
        %v945 = vadd.f32 0.0, %v944
        %v946 = vpop.f32.mrb[0].mxu0
        %947 = vmatprep.mubr.f32.mxu0 0.0
        %948 = vmatmul.mubr.f32.gmra.mrb[0].mxu0 %v828
        %v949 = vpop.f32.mrb[0].mxu0
        %v950 = vadd.f32 0.0, %v949
        %v951 = vpop.f32.mrb[0].mxu0
        %952 = vmatprep.mubr.f32.mxu0 0.0
        %953 = vmatmul.mubr.f32.gmra.mrb[0].mxu0 %v831
        %v954 = vpop.f32.mrb[0].mxu0
        %v955 = vadd.f32 0.0, %v954
        %v956 = vpop.f32.mrb[0].mxu0
        %957 = vmatprep.mubr.f32.mxu0 0.0
        %958 = vmatmul.mubr.f32.gmra.mrb[0].mxu0 %v834
        %v959 = vpop.f32.mrb[0].mxu0
        %v960 = vadd.f32 0.0, %v959
        %v961 = vpop.f32.mrb[0].mxu0
        %962 = vmatprep.mubr.f32.mxu0 0.0
        %963 = vmatmul.mubr.f32.gmra.mrb[0].mxu0 %v837
        %v964 = vpop.f32.mrb[0].mxu0
        %v965 = vadd.f32 0.0, %v964
        %v966 = vpop.f32.mrb[0].mxu0
        %967 = vmatprep.mubr.f32.mxu0 0.0
        %968 = vmatmul.mubr.f32.gmra.mrb[0].mxu0 %v840
        %v969 = vpop.f32.mrb[0].mxu0
        %v970 = vadd.f32 0.0, %v969
        %v971 = vpop.f32.mrb[0].mxu0
        %972 = vmatprep.mubr.f32.mxu0 0.0
        %973 = vmatmul.mubr.f32.gmra.mrb[0].mxu0 %v843
        %v974 = vpop.f32.mrb[0].mxu0
        %v975 = vadd.f32 0.0, %v974
        %v976 = vpop.f32.mrb[0].mxu0
        %977 = vmatprep.mubr.f32.mxu0 0.0
        %978 = vmatmul.mubr.f32.gmra.mrb[0].mxu0 %v846
        %v979 = vpop.f32.mrb[0].mxu0
        %v980 = vadd.f32 0.0, %v979
        %v981 = vpop.f32.mrb[0].mxu0
        %982 = vmatprep.mubr.f32.mxu0 0.0
        %983 = vmatmul.mubr.f32.gmra.mrb[0].mxu0 %v849
        %v984 = vpop.f32.mrb[0].mxu0
        %v985 = vadd.f32 0.0, %v984
        %v986 = vpop.f32.mrb[0].mxu0
        %987 = vmatprep.mubr.f32.mxu0 0.0
        %988 = vmatmul.mubr.f32.gmra.mrb[0].mxu0 %v852
        %v989 = vpop.f32.mrb[0].mxu0
        %v990 = vadd.f32 0.0, %v989
        %v991 = vpop.f32.mrb[0].mxu0
        %992 = vmatprep.mubr.f32.mxu0 0.0
        %993 = vmatmul.mubr.f32.gmra.mrb[0].mxu0 %v855
        %v994 = vpop.f32.mrb[0].mxu0
        %v995 = vadd.f32 0.0, %v994
        %v996 = vpop.f32.mrb[0].mxu0
        %997 = vmatprep.mubr.f32.mxu0 0.0
        %998 = vmatmul.mubr.f32.gmra.mrb[0].mxu0 %v858
        %v999 = vpop.f32.mrb[0].mxu0
        %v1000 = vadd.f32 0.0, %v999
        %v1001 = vpop.f32.mrb[0].mxu0
        %1002 = vmatprep.mubr.f32.mxu0 0.0
        %1003 = vmatmul.mubr.f32.gmra.mrb[0].mxu0 %v861
        %v1004 = vpop.f32.mrb[0].mxu0
        %v1005 = vadd.f32 0.0, %v1004
        %v1006 = vpop.f32.mrb[0].mxu0
        %1007 = vdwg.mxu0
        %v1008 = vmul.f32 %v701, %v810
        %v1009 = vmul.f32 %v702, %v811
        %v1010 = vmul.f32 %v703, %v812
        %v1011 = vmul.f32 %v704, %v813
        %1012 = vmatprep.subr.mxu0 0.0
        %1013 = vmatpush1.msra.mxu0 %v1008
        %1014 = vmatprep.subr.mxu0 0.0
        %1015 = vmatpush1.msra.mxu0 %v1009
        %1016 = vmatprep.subr.mxu0 0.0
        %1017 = vmatpush1.msra.mxu0 %v1010
        %1018 = vmatprep.subr.mxu0 0.0
        %1019 = vmatpush1.msra.mxu0 %v1011
        %1020 = vmatprep.subr.mxu0 0.0
        %1021 = vmatpush1.msra.mxu0 0.0
        %1022 = vmatprep.subr.mxu0 0.0
        %1023 = vmatpush1.msra.mxu0 0.0
        %1024 = vmatprep.subr.mxu0 0.0
        %1025 = vmatpush1.msra.mxu0 0.0
        %1026 = vmatprep.subr.mxu0 0.0
        %1027 = vmatpush1.msra.mxu0 0.0
        %1028 = vmatprep.subr.mxu0 0.0
        %1029 = vmatpush1.msra.mxu0 0.0
        %1030 = vmatprep.subr.mxu0 0.0
        %1031 = vmatpush1.msra.mxu0 0.0
        %1032 = vmatprep.subr.mxu0 0.0
        %1033 = vmatpush1.msra.mxu0 0.0
        %1034 = vmatprep.subr.mxu0 0.0
        %1035 = vmatpush1.msra.mxu0 0.0
        %1036 = vmatprep.subr.mxu0 0.0
        %1037 = vmatpush1.msra.mxu0 0.0
        %1038 = vmatprep.subr.mxu0 0.0
        %1039 = vmatpush1.msra.mxu0 0.0
        %1040 = vmatprep.subr.mxu0 0.0
        %1041 = vmatpush1.msra.mxu0 0.0
        %1042 = vmatprep.subr.mxu0 0.0
        %1043 = vmatpush1.msra.mxu0 0.0
        %1044 = vmatprep.subr.mxu0 0.0
        %1045 = vmatpush1.msra.mxu0 0.0
        %1046 = vmatprep.subr.mxu0 0.0
        %1047 = vmatpush1.msra.mxu0 0.0
        %1048 = vmatprep.subr.mxu0 0.0
        %1049 = vmatpush1.msra.mxu0 0.0
        %1050 = vmatprep.subr.mxu0 0.0
        %1051 = vmatpush1.msra.mxu0 0.0
        %1052 = vmatprep.subr.mxu0 0.0
        %1053 = vmatpush1.msra.mxu0 0.0
        %1054 = vmatprep.subr.mxu0 0.0
        %1055 = vmatpush1.msra.mxu0 0.0
        %1056 = vmatprep.subr.mxu0 0.0
        %1057 = vmatpush1.msra.mxu0 0.0
        %1058 = vmatprep.subr.mxu0 0.0
        %1059 = vmatpush1.msra.mxu0 0.0
        %1060 = vmatprep.subr.mxu0 0.0
        %1061 = vmatpush1.msra.mxu0 0.0
        %1062 = vmatprep.subr.mxu0 0.0
        %1063 = vmatpush1.msra.mxu0 0.0
        %1064 = vmatprep.subr.mxu0 0.0
        %1065 = vmatpush1.msra.mxu0 0.0
        %1066 = vmatprep.subr.mxu0 0.0
        %1067 = vmatpush1.msra.mxu0 0.0
        %1068 = vmatprep.subr.mxu0 0.0
        %1069 = vmatpush1.msra.mxu0 0.0
        %1070 = vmatprep.subr.mxu0 0.0
        %1071 = vmatpush1.msra.mxu0 0.0
        %1072 = vmatprep.subr.mxu0 0.0
        %1073 = vmatpush1.msra.mxu0 0.0
        %1074 = vmatprep.subr.mxu0 0.0
        %1075 = vmatpush1.msra.mxu0 0.0
        %1076 = vmatprep.mubr.f32.mxu0 0.0
        %1077 = vmatmul.mubr.f32.gmra.mrb[0].mxu0 %v816
        %v1078 = vpop.f32.mrb[0].mxu0
        %v1079 = vadd.f32 0.0, %v1078
        %v1080 = vpop.f32.mrb[0].mxu0
        %1081 = vmatprep.mubr.f32.mxu0 0.0
        %1082 = vmatmul.mubr.f32.gmra.mrb[0].mxu0 %v819
        %v1083 = vpop.f32.mrb[0].mxu0
        %v1084 = vadd.f32 0.0, %v1083
        %v1085 = vpop.f32.mrb[0].mxu0
        %1086 = vmatprep.mubr.f32.mxu0 0.0
        %1087 = vmatmul.mubr.f32.gmra.mrb[0].mxu0 %v822
        %v1088 = vpop.f32.mrb[0].mxu0
        %v1089 = vadd.f32 0.0, %v1088
        %v1090 = vpop.f32.mrb[0].mxu0
        %1091 = vmatprep.mubr.f32.mxu0 0.0
        %1092 = vmatmul.mubr.f32.gmra.mrb[0].mxu0 %v825
        %v1093 = vpop.f32.mrb[0].mxu0
        %v1094 = vadd.f32 0.0, %v1093
        %v1095 = vpop.f32.mrb[0].mxu0
        %1096 = vmatprep.mubr.f32.mxu0 0.0
        %1097 = vmatmul.mubr.f32.gmra.mrb[0].mxu0 %v828
        %v1098 = vpop.f32.mrb[0].mxu0
        %v1099 = vadd.f32 0.0, %v1098
        %v1100 = vpop.f32.mrb[0].mxu0
        %1101 = vmatprep.mubr.f32.mxu0 0.0
        %1102 = vmatmul.mubr.f32.gmra.mrb[0].mxu0 %v831
        %v1103 = vpop.f32.mrb[0].mxu0
        %v1104 = vadd.f32 0.0, %v1103
        %v1105 = vpop.f32.mrb[0].mxu0
        %1106 = vmatprep.mubr.f32.mxu0 0.0
        %1107 = vmatmul.mubr.f32.gmra.mrb[0].mxu0 %v834
        %v1108 = vpop.f32.mrb[0].mxu0
        %v1109 = vadd.f32 0.0, %v1108
        %v1110 = vpop.f32.mrb[0].mxu0
        %1111 = vmatprep.mubr.f32.mxu0 0.0
        %1112 = vmatmul.mubr.f32.gmra.mrb[0].mxu0 %v837
        %v1113 = vpop.f32.mrb[0].mxu0
        %v1114 = vadd.f32 0.0, %v1113
        %v1115 = vpop.f32.mrb[0].mxu0
        %1116 = vmatprep.mubr.f32.mxu0 0.0
        %1117 = vmatmul.mubr.f32.gmra.mrb[0].mxu0 %v840
        %v1118 = vpop.f32.mrb[0].mxu0
        %v1119 = vadd.f32 0.0, %v1118
        %v1120 = vpop.f32.mrb[0].mxu0
        %1121 = vmatprep.mubr.f32.mxu0 0.0
        %1122 = vmatmul.mubr.f32.gmra.mrb[0].mxu0 %v843
        %v1123 = vpop.f32.mrb[0].mxu0
        %v1124 = vadd.f32 0.0, %v1123
        %v1125 = vpop.f32.mrb[0].mxu0
        %1126 = vmatprep.mubr.f32.mxu0 0.0
        %1127 = vmatmul.mubr.f32.gmra.mrb[0].mxu0 %v846
        %v1128 = vpop.f32.mrb[0].mxu0
        %v1129 = vadd.f32 0.0, %v1128
        %v1130 = vpop.f32.mrb[0].mxu0
        %1131 = vmatprep.mubr.f32.mxu0 0.0
        %1132 = vmatmul.mubr.f32.gmra.mrb[0].mxu0 %v849
        %v1133 = vpop.f32.mrb[0].mxu0
        %v1134 = vadd.f32 0.0, %v1133
        %v1135 = vpop.f32.mrb[0].mxu0
        %1136 = vmatprep.mubr.f32.mxu0 0.0
        %1137 = vmatmul.mubr.f32.gmra.mrb[0].mxu0 %v852
        %v1138 = vpop.f32.mrb[0].mxu0
        %v1139 = vadd.f32 0.0, %v1138
        %v1140 = vpop.f32.mrb[0].mxu0
        %1141 = vmatprep.mubr.f32.mxu0 0.0
        %1142 = vmatmul.mubr.f32.gmra.mrb[0].mxu0 %v855
        %v1143 = vpop.f32.mrb[0].mxu0
        %v1144 = vadd.f32 0.0, %v1143
        %v1145 = vpop.f32.mrb[0].mxu0
        %1146 = vmatprep.mubr.f32.mxu0 0.0
        %1147 = vmatmul.mubr.f32.gmra.mrb[0].mxu0 %v858
        %v1148 = vpop.f32.mrb[0].mxu0
        %v1149 = vadd.f32 0.0, %v1148
        %v1150 = vpop.f32.mrb[0].mxu0
        %1151 = vmatprep.mubr.f32.mxu0 0.0
        %1152 = vmatmul.mubr.f32.gmra.mrb[0].mxu0 %v861
        %v1153 = vpop.f32.mrb[0].mxu0
        %v1154 = vadd.f32 0.0, %v1153
        %v1155 = vpop.f32.mrb[0].mxu0
        %1156 = vdwg.mxu0
        %v1157 = vsub.f32 %v1079, %v416
        %v1158 = vsub.f32 %v1084, %v417
        %v1159 = vsub.f32 %v1089, %v418
        %v1160 = vsub.f32 %v1094, %v419
        %v1161 = vsub.f32 %v1099, %v420
        %v1162 = vsub.f32 %v1104, %v421
        %v1163 = vsub.f32 %v1109, %v422
        %v1164 = vsub.f32 %v1114, %v423
        %v1165 = vsub.f32 %v1119, %v424
        %v1166 = vsub.f32 %v1124, %v425
        %v1167 = vsub.f32 %v1129, %v426
        %v1168 = vsub.f32 %v1134, %v427
        %v1169 = vsub.f32 %v1139, %v428
        %v1170 = vsub.f32 %v1144, %v429
        %v1171 = vsub.f32 %v1149, %v430
        %v1172 = vsub.f32 %v1154, %v431
        %v1173 = vld [vmem:[%s394] sm:$0xff]
        %v1174 = vld [vmem:[%s394 + $0x8] sm:$0xff]
        %v1175 = vld [vmem:[%s394 + $0x10] sm:$0xff]
        %v1176 = vld [vmem:[%s394 + $0x18] sm:$0xff]
        %v1177 = vld [vmem:[%s394 + $0x20] sm:$0xff]
        %v1178 = vld [vmem:[%s394 + $0x28] sm:$0xff]
        %v1179 = vld [vmem:[%s394 + $0x30] sm:$0xff]
        %v1180 = vld [vmem:[%s394 + $0x38] sm:$0xff]
        %v1181 = vld [vmem:[%s394 + $0x40] sm:$0xff]
        %v1182 = vld [vmem:[%s394 + $0x48] sm:$0xff]
        %v1183 = vld [vmem:[%s394 + $0x50] sm:$0xff]
        %v1184 = vld [vmem:[%s394 + $0x58] sm:$0xff]
        %v1185 = vld [vmem:[%s394 + $0x60] sm:$0xff]
        %v1186 = vld [vmem:[%s394 + $0x68] sm:$0xff]
        %v1187 = vld [vmem:[%s394 + $0x70] sm:$0xff]
        %v1188 = vld [vmem:[%s394 + $0x78] sm:$0xff]
        %1190 = vset.pattern.permute.xlu0 0
        %1191 = vperm.xlu0 %1190, %v930
        %v1192 = vpop.permute.xlu0 %1191
        %1195 = vset.pattern.permute.xlu0 0
        %1196 = vperm.xlu0 %1195, %v935
        %v1197 = vpop.permute.xlu0 %1196
        %1200 = vset.pattern.permute.xlu0 0
        %1201 = vperm.xlu0 %1200, %v940
        %v1202 = vpop.permute.xlu0 %1201
        %1205 = vset.pattern.permute.xlu0 0
        %1206 = vperm.xlu0 %1205, %v945
        %v1207 = vpop.permute.xlu0 %1206
        %1210 = vset.pattern.permute.xlu0 0
        %1211 = vperm.xlu0 %1210, %v950
        %v1212 = vpop.permute.xlu0 %1211
        %1215 = vset.pattern.permute.xlu0 0
        %1216 = vperm.xlu0 %1215, %v955
        %v1217 = vpop.permute.xlu0 %1216
        %1220 = vset.pattern.permute.xlu0 0
        %1221 = vperm.xlu0 %1220, %v960
        %v1222 = vpop.permute.xlu0 %1221
        %1225 = vset.pattern.permute.xlu0 0
        %1226 = vperm.xlu0 %1225, %v965
        %v1227 = vpop.permute.xlu0 %1226
        %1230 = vset.pattern.permute.xlu0 0
        %1231 = vperm.xlu0 %1230, %v970
        %v1232 = vpop.permute.xlu0 %1231
        %1235 = vset.pattern.permute.xlu0 0
        %1236 = vperm.xlu0 %1235, %v975
        %v1237 = vpop.permute.xlu0 %1236
        %1240 = vset.pattern.permute.xlu0 0
        %1241 = vperm.xlu0 %1240, %v980
        %v1242 = vpop.permute.xlu0 %1241
        %1245 = vset.pattern.permute.xlu0 0
        %1246 = vperm.xlu0 %1245, %v985
        %v1247 = vpop.permute.xlu0 %1246
        %1250 = vset.pattern.permute.xlu0 0
        %1251 = vperm.xlu0 %1250, %v990
        %v1252 = vpop.permute.xlu0 %1251
        %1255 = vset.pattern.permute.xlu0 0
        %1256 = vperm.xlu0 %1255, %v995
        %v1257 = vpop.permute.xlu0 %1256
        %1260 = vset.pattern.permute.xlu0 0
        %1261 = vperm.xlu0 %1260, %v1000
        %v1262 = vpop.permute.xlu0 %1261
        %1265 = vset.pattern.permute.xlu0 0
        %1266 = vperm.xlu0 %1265, %v1005
        %v1267 = vpop.permute.xlu0 %1266
        %v1269 = vmul.f32 %v1173, %v1192
        %v1270 = vmul.f32 %v1174, %v1197
        %v1271 = vmul.f32 %v1175, %v1202
        %v1272 = vmul.f32 %v1176, %v1207
        %v1273 = vmul.f32 %v1177, %v1212
        %v1274 = vmul.f32 %v1178, %v1217
        %v1275 = vmul.f32 %v1179, %v1222
        %v1276 = vmul.f32 %v1180, %v1227
        %v1277 = vmul.f32 %v1181, %v1232
        %v1278 = vmul.f32 %v1182, %v1237
        %v1279 = vmul.f32 %v1183, %v1242
        %v1280 = vmul.f32 %v1184, %v1247
        %v1281 = vmul.f32 %v1185, %v1252
        %v1282 = vmul.f32 %v1186, %v1257
        %v1283 = vmul.f32 %v1187, %v1262
        %v1284 = vmul.f32 %v1188, %v1267
        %1286 = vset.pattern.permute.xlu0 0
        %1287 = vperm.xlu0 %1286, %v1157
        %v1288 = vpop.permute.xlu0 %1287
        %1291 = vset.pattern.permute.xlu0 0
        %1292 = vperm.xlu0 %1291, %v1158
        %v1293 = vpop.permute.xlu0 %1292
        %1296 = vset.pattern.permute.xlu0 0
        %1297 = vperm.xlu0 %1296, %v1159
        %v1298 = vpop.permute.xlu0 %1297
        %1301 = vset.pattern.permute.xlu0 0
        %1302 = vperm.xlu0 %1301, %v1160
        %v1303 = vpop.permute.xlu0 %1302
        %1306 = vset.pattern.permute.xlu0 0
        %1307 = vperm.xlu0 %1306, %v1161
        %v1308 = vpop.permute.xlu0 %1307
        %1311 = vset.pattern.permute.xlu0 0
        %1312 = vperm.xlu0 %1311, %v1162
        %v1313 = vpop.permute.xlu0 %1312
        %1316 = vset.pattern.permute.xlu0 0
        %1317 = vperm.xlu0 %1316, %v1163
        %v1318 = vpop.permute.xlu0 %1317
        %1321 = vset.pattern.permute.xlu0 0
        %1322 = vperm.xlu0 %1321, %v1164
        %v1323 = vpop.permute.xlu0 %1322
        %1326 = vset.pattern.permute.xlu0 0
        %1327 = vperm.xlu0 %1326, %v1165
        %v1328 = vpop.permute.xlu0 %1327
        %1331 = vset.pattern.permute.xlu0 0
        %1332 = vperm.xlu0 %1331, %v1166
        %v1333 = vpop.permute.xlu0 %1332
        %1336 = vset.pattern.permute.xlu0 0
        %1337 = vperm.xlu0 %1336, %v1167
        %v1338 = vpop.permute.xlu0 %1337
        %1341 = vset.pattern.permute.xlu0 0
        %1342 = vperm.xlu0 %1341, %v1168
        %v1343 = vpop.permute.xlu0 %1342
        %1346 = vset.pattern.permute.xlu0 0
        %1347 = vperm.xlu0 %1346, %v1169
        %v1348 = vpop.permute.xlu0 %1347
        %1351 = vset.pattern.permute.xlu0 0
        %1352 = vperm.xlu0 %1351, %v1170
        %v1353 = vpop.permute.xlu0 %1352
        %1356 = vset.pattern.permute.xlu0 0
        %1357 = vperm.xlu0 %1356, %v1171
        %v1358 = vpop.permute.xlu0 %1357
        %1361 = vset.pattern.permute.xlu0 0
        %1362 = vperm.xlu0 %1361, %v1172
        %v1363 = vpop.permute.xlu0 %1362
        %v1365 = vsub.f32 %v1269, %v1288
        %v1366 = vsub.f32 %v1270, %v1293
        %v1367 = vsub.f32 %v1271, %v1298
        %v1368 = vsub.f32 %v1272, %v1303
        %v1369 = vsub.f32 %v1273, %v1308
        %v1370 = vsub.f32 %v1274, %v1313
        %v1371 = vsub.f32 %v1275, %v1318
        %v1372 = vsub.f32 %v1276, %v1323
        %v1373 = vsub.f32 %v1277, %v1328
        %v1374 = vsub.f32 %v1278, %v1333
        %v1375 = vsub.f32 %v1279, %v1338
        %v1376 = vsub.f32 %v1280, %v1343
        %v1377 = vsub.f32 %v1281, %v1348
        %v1378 = vsub.f32 %v1282, %v1353
        %v1379 = vsub.f32 %v1283, %v1358
        %v1380 = vsub.f32 %v1284, %v1363
        %v1381 = vpack.c.bf16 %v1366, %v1365
        %v1382 = vpack.c.bf16 %v1368, %v1367
        %v1383 = vpack.c.bf16 %v1370, %v1369
        %v1384 = vpack.c.bf16 %v1372, %v1371
        %v1385 = vpack.c.bf16 %v1374, %v1373
        %v1386 = vpack.c.bf16 %v1376, %v1375
        %v1387 = vpack.c.bf16 %v1378, %v1377
        %v1388 = vpack.c.bf16 %v1380, %v1379
        %1390 = vset.pattern.permute.xlu0 0
        %1391 = vperm.xlu0 %1390, %v440
        %v1392 = vpop.permute.xlu0 %1391
        %1395 = vset.pattern.permute.xlu0 0
        %1396 = vperm.xlu0 %1395, %v441
        %v1397 = vpop.permute.xlu0 %1396
        %1400 = vset.pattern.permute.xlu0 0
        %1401 = vperm.xlu0 %1400, %v442
        %v1402 = vpop.permute.xlu0 %1401
        %1405 = vset.pattern.permute.xlu0 0
        %1406 = vperm.xlu0 %1405, %v443
        %v1407 = vpop.permute.xlu0 %1406
        %1410 = vset.pattern.permute.xlu0 0
        %1411 = vperm.xlu0 %1410, %v444
        %v1412 = vpop.permute.xlu0 %1411
        %1415 = vset.pattern.permute.xlu0 0
        %1416 = vperm.xlu0 %1415, %v445
        %v1417 = vpop.permute.xlu0 %1416
        %1420 = vset.pattern.permute.xlu0 0
        %1421 = vperm.xlu0 %1420, %v446
        %v1422 = vpop.permute.xlu0 %1421
        %1425 = vset.pattern.permute.xlu0 0
        %1426 = vperm.xlu0 %1425, %v447
        %v1427 = vpop.permute.xlu0 %1426
        %v1437 = vunpack.c.l.b16 %v432
        %v1438 = vunpack.c.l.b16 %v433
        %v1439 = vunpack.c.l.b16 %v434
        %v1440 = vunpack.c.l.b16 %v435
        %v1441 = vunpack.c.l.b16 %v436
        %v1442 = vunpack.c.l.b16 %v437
        %v1443 = vunpack.c.l.b16 %v438
        %v1444 = vunpack.c.l.b16 %v439
        %v1445 = vpack.c.b16 %v1438, %v1437
        %v1446 = vpack.c.b16 %v1440, %v1439
        %v1447 = vpack.c.b16 %v1442, %v1441
        %v1448 = vpack.c.b16 %v1444, %v1443
        %1453 = vmatprep.subr.bf16.mxu0 0
        %1454 = vmatpush1.bf16.msra.mxu0 %v1381
        %1455 = vmatprep.subr.bf16.mxu0 0
        %1456 = vmatpush1.bf16.msra.mxu0 %v1382
        %1457 = vmatprep.subr.bf16.mxu0 0
        %1458 = vmatpush1.bf16.msra.mxu0 %v1383
        %1459 = vmatprep.subr.bf16.mxu0 0
        %1460 = vmatpush1.bf16.msra.mxu0 %v1384
        %1461 = vmatprep.subr.bf16.mxu0 0
        %1462 = vmatpush1.bf16.msra.mxu0 %v1385
        %1463 = vmatprep.subr.bf16.mxu0 0
        %1464 = vmatpush1.bf16.msra.mxu0 %v1386
        %1465 = vmatprep.subr.bf16.mxu0 0
        %1466 = vmatpush1.bf16.msra.mxu0 %v1387
        %1467 = vmatprep.subr.bf16.mxu0 0
        %1468 = vmatpush1.bf16.msra.mxu0 %v1388
        %1469 = vmatprep.subr.bf16.mxu0 0
        %1470 = vmatpush1.bf16.msra.mxu0 0
        %1471 = vmatprep.subr.bf16.mxu0 0
        %1472 = vmatpush1.bf16.msra.mxu0 0
        %1473 = vmatprep.subr.bf16.mxu0 0
        %1474 = vmatpush1.bf16.msra.mxu0 0
        %1475 = vmatprep.subr.bf16.mxu0 0
        %1476 = vmatpush1.bf16.msra.mxu0 0
        %1477 = vmatprep.subr.bf16.mxu0 0
        %1478 = vmatpush1.bf16.msra.mxu0 0
        %1479 = vmatprep.subr.bf16.mxu0 0
        %1480 = vmatpush1.bf16.msra.mxu0 0
        %1481 = vmatprep.subr.bf16.mxu0 0
        %1482 = vmatpush1.bf16.msra.mxu0 0
        %1483 = vmatprep.subr.bf16.mxu0 0
        %1484 = vmatpush1.bf16.msra.mxu0 0
        %1485 = vmatprep.mubr.bf16.mxu0 0
        %1486 = vmatmul.mubr.bf16.gmra.mrb[0].mxu0 %v1445
        %v1487 = vpop.f32.mrb[0].mxu0
        %v1488 = vadd.f32 %v1392, %v1487
        %v1489 = vpop.f32.mrb[0].mxu0
        %v1490 = vpop.f32.mrb[0].mxu0
        %v1491 = vadd.f32 %v1397, %v1490
        %v1492 = vpop.f32.mrb[0].mxu0
        %1493 = vmatprep.mubr.bf16.mxu0 0
        %1494 = vmatmul.mubr.bf16.gmra.mrb[0].mxu0 %v1446
        %v1495 = vpop.f32.mrb[0].mxu0
        %v1496 = vadd.f32 %v1402, %v1495
        %v1497 = vpop.f32.mrb[0].mxu0
        %v1498 = vpop.f32.mrb[0].mxu0
        %v1499 = vadd.f32 %v1407, %v1498
        %v1500 = vpop.f32.mrb[0].mxu0
        %1501 = vmatprep.mubr.bf16.mxu0 0
        %1502 = vmatmul.mubr.bf16.gmra.mrb[0].mxu0 %v1447
        %v1503 = vpop.f32.mrb[0].mxu0
        %v1504 = vadd.f32 %v1412, %v1503
        %v1505 = vpop.f32.mrb[0].mxu0
        %v1506 = vpop.f32.mrb[0].mxu0
        %v1507 = vadd.f32 %v1417, %v1506
        %v1508 = vpop.f32.mrb[0].mxu0
        %1509 = vmatprep.mubr.bf16.mxu0 0
        %1510 = vmatmul.mubr.bf16.gmra.mrb[0].mxu0 %v1448
        %v1511 = vpop.f32.mrb[0].mxu0
        %v1512 = vadd.f32 %v1422, %v1511
        %v1513 = vpop.f32.mrb[0].mxu0
        %v1514 = vpop.f32.mrb[0].mxu0
        %v1515 = vadd.f32 %v1427, %v1514
        %v1516 = vpop.f32.mrb[0].mxu0
        %1517 = vdwg.mxu0
        %v1518 = vpack.c.bf16 %v1491, %v1488
        %v1519 = vpack.c.bf16 %v1499, %v1496
        %v1520 = vpack.c.bf16 %v1507, %v1504
        %v1521 = vpack.c.bf16 %v1515, %v1512
        %v1554 = vunpack.c.l.b16 %v448
        %v1555 = vunpack.c.l.b16 %v449
        %v1556 = vunpack.c.l.b16 %v450
        %v1557 = vunpack.c.l.b16 %v451
        %v1558 = vunpack.c.l.b16 %v452
        %v1559 = vunpack.c.l.b16 %v453
        %v1560 = vunpack.c.l.b16 %v454
        %v1561 = vunpack.c.l.b16 %v455
        %v1562 = vunpack.c.l.b16 %v456
        %v1563 = vunpack.c.l.b16 %v457
        %v1564 = vunpack.c.l.b16 %v458
        %v1565 = vunpack.c.l.b16 %v459
        %v1566 = vunpack.c.l.b16 %v460
        %v1567 = vunpack.c.l.b16 %v461
        %v1568 = vunpack.c.l.b16 %v462
        %v1569 = vunpack.c.l.b16 %v463
        %v1570 = vunpack.c.l.b16 %v464
        %v1571 = vunpack.c.l.b16 %v465
        %v1572 = vunpack.c.l.b16 %v466
        %v1573 = vunpack.c.l.b16 %v467
        %v1574 = vunpack.c.l.b16 %v468
        %v1575 = vunpack.c.l.b16 %v469
        %v1576 = vunpack.c.l.b16 %v470
        %v1577 = vunpack.c.l.b16 %v471
        %v1578 = vunpack.c.l.b16 %v472
        %v1579 = vunpack.c.l.b16 %v473
        %v1580 = vunpack.c.l.b16 %v474
        %v1581 = vunpack.c.l.b16 %v475
        %v1582 = vunpack.c.l.b16 %v476
        %v1583 = vunpack.c.l.b16 %v477
        %v1584 = vunpack.c.l.b16 %v478
        %v1585 = vunpack.c.l.b16 %v479
        %v1586 = vpack.c.b16 %v1555, %v1554
        %v1587 = vpack.c.b16 %v1557, %v1556
        %v1588 = vpack.c.b16 %v1559, %v1558
        %v1589 = vpack.c.b16 %v1561, %v1560
        %v1590 = vpack.c.b16 %v1563, %v1562
        %v1591 = vpack.c.b16 %v1565, %v1564
        %v1592 = vpack.c.b16 %v1567, %v1566
        %v1593 = vpack.c.b16 %v1569, %v1568
        %v1594 = vpack.c.b16 %v1571, %v1570
        %v1595 = vpack.c.b16 %v1573, %v1572
        %v1596 = vpack.c.b16 %v1575, %v1574
        %v1597 = vpack.c.b16 %v1577, %v1576
        %v1598 = vpack.c.b16 %v1579, %v1578
        %v1599 = vpack.c.b16 %v1581, %v1580
        %v1600 = vpack.c.b16 %v1583, %v1582
        %v1601 = vpack.c.b16 %v1585, %v1584
        %vm1602 = vcmask 523264
        %v1604 = vsel %vm1602, %v1586, 0
        %v1607 = vsel %vm1602, %v1587, 0
        %v1610 = vsel %vm1602, %v1588, 0
        %v1613 = vsel %vm1602, %v1589, 0
        %v1616 = vsel %vm1602, %v1590, 0
        %v1619 = vsel %vm1602, %v1591, 0
        %v1622 = vsel %vm1602, %v1592, 0
        %v1625 = vsel %vm1602, %v1593, 0
        %v1628 = vsel %vm1602, %v1594, 0
        %v1631 = vsel %vm1602, %v1595, 0
        %v1634 = vsel %vm1602, %v1596, 0
        %v1637 = vsel %vm1602, %v1597, 0
        %v1640 = vsel %vm1602, %v1598, 0
        %v1643 = vsel %vm1602, %v1599, 0
        %v1646 = vsel %vm1602, %v1600, 0
        %v1649 = vsel %vm1602, %v1601, 0
        %1651 = vmatprep.subr.bf16.mxu0 0
        %1652 = vmatpush1.bf16.msra.mxu0 %v1518
        %1653 = vmatprep.subr.bf16.mxu0 0
        %1654 = vmatpush1.bf16.msra.mxu0 %v1519
        %1655 = vmatprep.subr.bf16.mxu0 0
        %1656 = vmatpush1.bf16.msra.mxu0 %v1520
        %1657 = vmatprep.subr.bf16.mxu0 0
        %1658 = vmatpush1.bf16.msra.mxu0 %v1521
        %1659 = vmatprep.subr.bf16.mxu0 0
        %1660 = vmatpush1.bf16.msra.mxu0 0
        %1661 = vmatprep.subr.bf16.mxu0 0
        %1662 = vmatpush1.bf16.msra.mxu0 0
        %1663 = vmatprep.subr.bf16.mxu0 0
        %1664 = vmatpush1.bf16.msra.mxu0 0
        %1665 = vmatprep.subr.bf16.mxu0 0
        %1666 = vmatpush1.bf16.msra.mxu0 0
        %1667 = vmatprep.subr.bf16.mxu0 0
        %1668 = vmatpush1.bf16.msra.mxu0 0
        %1669 = vmatprep.subr.bf16.mxu0 0
        %1670 = vmatpush1.bf16.msra.mxu0 0
        %1671 = vmatprep.subr.bf16.mxu0 0
        %1672 = vmatpush1.bf16.msra.mxu0 0
        %1673 = vmatprep.subr.bf16.mxu0 0
        %1674 = vmatpush1.bf16.msra.mxu0 0
        %1675 = vmatprep.subr.bf16.mxu0 0
        %1676 = vmatpush1.bf16.msra.mxu0 0
        %1677 = vmatprep.subr.bf16.mxu0 0
        %1678 = vmatpush1.bf16.msra.mxu0 0
        %1679 = vmatprep.subr.bf16.mxu0 0
        %1680 = vmatpush1.bf16.msra.mxu0 0
        %1681 = vmatprep.subr.bf16.mxu0 0
        %1682 = vmatpush1.bf16.msra.mxu0 0
        %1683 = vmatprep.mubr.bf16.mxu0 0
        %1684 = vmatmul.mubr.bf16.gmra.mrb[0].mxu0 %v1604
        %v1685 = vpop.f32.mrb[0].mxu0
        %v1686 = vadd.f32 0.0, %v1685
        %v1687 = vpop.f32.mrb[0].mxu0
        %v1688 = vpop.f32.mrb[0].mxu0
        %v1689 = vadd.f32 0.0, %v1688
        %v1690 = vpop.f32.mrb[0].mxu0
        %1691 = vmatprep.mubr.bf16.mxu0 0
        %1692 = vmatmul.mubr.bf16.gmra.mrb[0].mxu0 %v1607
        %v1693 = vpop.f32.mrb[0].mxu0
        %v1694 = vadd.f32 0.0, %v1693
        %v1695 = vpop.f32.mrb[0].mxu0
        %v1696 = vpop.f32.mrb[0].mxu0
        %v1697 = vadd.f32 0.0, %v1696
        %v1698 = vpop.f32.mrb[0].mxu0
        %1699 = vmatprep.mubr.bf16.mxu0 0
        %1700 = vmatmul.mubr.bf16.gmra.mrb[0].mxu0 %v1610
        %v1701 = vpop.f32.mrb[0].mxu0
        %v1702 = vadd.f32 0.0, %v1701
        %v1703 = vpop.f32.mrb[0].mxu0
        %v1704 = vpop.f32.mrb[0].mxu0
        %v1705 = vadd.f32 0.0, %v1704
        %v1706 = vpop.f32.mrb[0].mxu0
        %1707 = vmatprep.mubr.bf16.mxu0 0
        %1708 = vmatmul.mubr.bf16.gmra.mrb[0].mxu0 %v1613
        %v1709 = vpop.f32.mrb[0].mxu0
        %v1710 = vadd.f32 0.0, %v1709
        %v1711 = vpop.f32.mrb[0].mxu0
        %v1712 = vpop.f32.mrb[0].mxu0
        %v1713 = vadd.f32 0.0, %v1712
        %v1714 = vpop.f32.mrb[0].mxu0
        %1715 = vmatprep.mubr.bf16.mxu0 0
        %1716 = vmatmul.mubr.bf16.gmra.mrb[0].mxu0 %v1616
        %v1717 = vpop.f32.mrb[0].mxu0
        %v1718 = vadd.f32 0.0, %v1717
        %v1719 = vpop.f32.mrb[0].mxu0
        %v1720 = vpop.f32.mrb[0].mxu0
        %v1721 = vadd.f32 0.0, %v1720
        %v1722 = vpop.f32.mrb[0].mxu0
        %1723 = vmatprep.mubr.bf16.mxu0 0
        %1724 = vmatmul.mubr.bf16.gmra.mrb[0].mxu0 %v1619
        %v1725 = vpop.f32.mrb[0].mxu0
        %v1726 = vadd.f32 0.0, %v1725
        %v1727 = vpop.f32.mrb[0].mxu0
        %v1728 = vpop.f32.mrb[0].mxu0
        %v1729 = vadd.f32 0.0, %v1728
        %v1730 = vpop.f32.mrb[0].mxu0
        %1731 = vmatprep.mubr.bf16.mxu0 0
        %1732 = vmatmul.mubr.bf16.gmra.mrb[0].mxu0 %v1622
        %v1733 = vpop.f32.mrb[0].mxu0
        %v1734 = vadd.f32 0.0, %v1733
        %v1735 = vpop.f32.mrb[0].mxu0
        %v1736 = vpop.f32.mrb[0].mxu0
        %v1737 = vadd.f32 0.0, %v1736
        %v1738 = vpop.f32.mrb[0].mxu0
        %1739 = vmatprep.mubr.bf16.mxu0 0
        %1740 = vmatmul.mubr.bf16.gmra.mrb[0].mxu0 %v1625
        %v1741 = vpop.f32.mrb[0].mxu0
        %v1742 = vadd.f32 0.0, %v1741
        %v1743 = vpop.f32.mrb[0].mxu0
        %v1744 = vpop.f32.mrb[0].mxu0
        %v1745 = vadd.f32 0.0, %v1744
        %v1746 = vpop.f32.mrb[0].mxu0
        %1747 = vmatprep.mubr.bf16.mxu0 0
        %1748 = vmatmul.mubr.bf16.gmra.mrb[0].mxu0 %v1628
        %v1749 = vpop.f32.mrb[0].mxu0
        %v1750 = vadd.f32 0.0, %v1749
        %v1751 = vpop.f32.mrb[0].mxu0
        %v1752 = vpop.f32.mrb[0].mxu0
        %v1753 = vadd.f32 0.0, %v1752
        %v1754 = vpop.f32.mrb[0].mxu0
        %1755 = vmatprep.mubr.bf16.mxu0 0
        %1756 = vmatmul.mubr.bf16.gmra.mrb[0].mxu0 %v1631
        %v1757 = vpop.f32.mrb[0].mxu0
        %v1758 = vadd.f32 0.0, %v1757
        %v1759 = vpop.f32.mrb[0].mxu0
        %v1760 = vpop.f32.mrb[0].mxu0
        %v1761 = vadd.f32 0.0, %v1760
        %v1762 = vpop.f32.mrb[0].mxu0
        %1763 = vmatprep.mubr.bf16.mxu0 0
        %1764 = vmatmul.mubr.bf16.gmra.mrb[0].mxu0 %v1634
        %v1765 = vpop.f32.mrb[0].mxu0
        %v1766 = vadd.f32 0.0, %v1765
        %v1767 = vpop.f32.mrb[0].mxu0
        %v1768 = vpop.f32.mrb[0].mxu0
        %v1769 = vadd.f32 0.0, %v1768
        %v1770 = vpop.f32.mrb[0].mxu0
        %1771 = vmatprep.mubr.bf16.mxu0 0
        %1772 = vmatmul.mubr.bf16.gmra.mrb[0].mxu0 %v1637
        %v1773 = vpop.f32.mrb[0].mxu0
        %v1774 = vadd.f32 0.0, %v1773
        %v1775 = vpop.f32.mrb[0].mxu0
        %v1776 = vpop.f32.mrb[0].mxu0
        %v1777 = vadd.f32 0.0, %v1776
        %v1778 = vpop.f32.mrb[0].mxu0
        %1779 = vmatprep.mubr.bf16.mxu0 0
        %1780 = vmatmul.mubr.bf16.gmra.mrb[0].mxu0 %v1640
        %v1781 = vpop.f32.mrb[0].mxu0
        %v1782 = vadd.f32 0.0, %v1781
        %v1783 = vpop.f32.mrb[0].mxu0
        %v1784 = vpop.f32.mrb[0].mxu0
        %v1785 = vadd.f32 0.0, %v1784
        %v1786 = vpop.f32.mrb[0].mxu0
        %1787 = vmatprep.mubr.bf16.mxu0 0
        %1788 = vmatmul.mubr.bf16.gmra.mrb[0].mxu0 %v1643
        %v1789 = vpop.f32.mrb[0].mxu0
        %v1790 = vadd.f32 0.0, %v1789
        %v1791 = vpop.f32.mrb[0].mxu0
        %v1792 = vpop.f32.mrb[0].mxu0
        %v1793 = vadd.f32 0.0, %v1792
        %v1794 = vpop.f32.mrb[0].mxu0
        %1795 = vmatprep.mubr.bf16.mxu0 0
        %1796 = vmatmul.mubr.bf16.gmra.mrb[0].mxu0 %v1646
        %v1797 = vpop.f32.mrb[0].mxu0
        %v1798 = vadd.f32 0.0, %v1797
        %v1799 = vpop.f32.mrb[0].mxu0
        %v1800 = vpop.f32.mrb[0].mxu0
        %v1801 = vadd.f32 0.0, %v1800
        %v1802 = vpop.f32.mrb[0].mxu0
        %1803 = vmatprep.mubr.bf16.mxu0 0
        %1804 = vmatmul.mubr.bf16.gmra.mrb[0].mxu0 %v1649
        %v1805 = vpop.f32.mrb[0].mxu0
        %v1806 = vadd.f32 0.0, %v1805
        %v1807 = vpop.f32.mrb[0].mxu0
        %v1808 = vpop.f32.mrb[0].mxu0
        %v1809 = vadd.f32 0.0, %v1808
        %v1810 = vpop.f32.mrb[0].mxu0
        %1811 = vdwg.mxu0
        %v1812 = vmax.f32 %v1686, %v1702
        %v1813 = vmax.f32 %v1689, %v1705
        %v1814 = vmax.f32 %v1694, %v1710
        %v1815 = vmax.f32 %v1697, %v1713
        %v1816 = vmax.f32 %v1812, %v1718
        %v1817 = vmax.f32 %v1813, %v1721
        %v1818 = vmax.f32 %v1814, %v1726
        %v1819 = vmax.f32 %v1815, %v1729
        %v1820 = vmax.f32 %v1816, %v1734
        %v1821 = vmax.f32 %v1817, %v1737
        %v1822 = vmax.f32 %v1818, %v1742
        %v1823 = vmax.f32 %v1819, %v1745
        %v1824 = vmax.f32 %v1820, %v1750
        %v1825 = vmax.f32 %v1821, %v1753
        %v1826 = vmax.f32 %v1822, %v1758
        %v1827 = vmax.f32 %v1823, %v1761
        %v1828 = vmax.f32 %v1824, %v1766
        %v1829 = vmax.f32 %v1825, %v1769
        %v1830 = vmax.f32 %v1826, %v1774
        %v1831 = vmax.f32 %v1827, %v1777
        %v1832 = vmax.f32 %v1828, %v1782
        %v1833 = vmax.f32 %v1829, %v1785
        %v1834 = vmax.f32 %v1830, %v1790
        %v1835 = vmax.f32 %v1831, %v1793
        %v1836 = vmax.f32 %v1832, %v1798
        %v1837 = vmax.f32 %v1833, %v1801
        %v1838 = vmax.f32 %v1834, %v1806
        %v1839 = vmax.f32 %v1835, %v1809
        %v1840 = vmax.f32 %v1836, %v1837
        %v1841 = vmax.f32 %v1838, %v1839
        %v1842 = vmax.f32 %v1840, %v1841
        %v1843 = vrot.slane %v1842, 4
        %v1844 = vmax.f32 %v1842, %v1843
        %v1845 = vrot.slane %v1844, 2
        %v1846 = vmax.f32 %v1844, %v1845
        %v1847 = vrot.slane %v1846, 1
        %v1848 = vmax.f32 %v1846, %v1847
        %v1849 = vsub.f32 %v1686, %v1848
        %v1850 = vsub.f32 %v1689, %v1848
        %v1851 = vsub.f32 %v1694, %v1848
        %v1852 = vsub.f32 %v1697, %v1848
        %v1853 = vsub.f32 %v1702, %v1848
        %v1854 = vsub.f32 %v1705, %v1848
        %v1855 = vsub.f32 %v1710, %v1848
        %v1856 = vsub.f32 %v1713, %v1848
        %v1857 = vsub.f32 %v1718, %v1848
        %v1858 = vsub.f32 %v1721, %v1848
        %v1859 = vsub.f32 %v1726, %v1848
        %v1860 = vsub.f32 %v1729, %v1848
        %v1861 = vsub.f32 %v1734, %v1848
        %v1862 = vsub.f32 %v1737, %v1848
        %v1863 = vsub.f32 %v1742, %v1848
        %v1864 = vsub.f32 %v1745, %v1848
        %v1865 = vsub.f32 %v1750, %v1848
        %v1866 = vsub.f32 %v1753, %v1848
        %v1867 = vsub.f32 %v1758, %v1848
        %v1868 = vsub.f32 %v1761, %v1848
        %v1869 = vsub.f32 %v1766, %v1848
        %v1870 = vsub.f32 %v1769, %v1848
        %v1871 = vsub.f32 %v1774, %v1848
        %v1872 = vsub.f32 %v1777, %v1848
        %v1873 = vsub.f32 %v1782, %v1848
        %v1874 = vsub.f32 %v1785, %v1848
        %v1875 = vsub.f32 %v1790, %v1848
        %v1876 = vsub.f32 %v1793, %v1848
        %v1877 = vsub.f32 %v1798, %v1848
        %v1878 = vsub.f32 %v1801, %v1848
        %v1879 = vsub.f32 %v1806, %v1848
        %v1880 = vsub.f32 %v1809, %v1848
        %v1881 = vmul.f32 %v1849, 1.442695
        %v1882 = vpow.pop %v1881
        %v1883 = vmul.f32 %v1850, 1.442695
        %v1884 = vpow.pop %v1883
        %v1885 = vmul.f32 %v1851, 1.442695
        %v1886 = vpow.pop %v1885
        %v1887 = vmul.f32 %v1852, 1.442695
        %v1888 = vpow.pop %v1887
        %v1889 = vmul.f32 %v1853, 1.442695
        %v1890 = vpow.pop %v1889
        %v1891 = vmul.f32 %v1854, 1.442695
        %v1892 = vpow.pop %v1891
        %v1893 = vmul.f32 %v1855, 1.442695
        %v1894 = vpow.pop %v1893
        %v1895 = vmul.f32 %v1856, 1.442695
        %v1896 = vpow.pop %v1895
        %v1897 = vmul.f32 %v1857, 1.442695
        %v1898 = vpow.pop %v1897
        %v1899 = vmul.f32 %v1858, 1.442695
        %v1900 = vpow.pop %v1899
        %v1901 = vmul.f32 %v1859, 1.442695
        %v1902 = vpow.pop %v1901
        %v1903 = vmul.f32 %v1860, 1.442695
        %v1904 = vpow.pop %v1903
        %v1905 = vmul.f32 %v1861, 1.442695
        %v1906 = vpow.pop %v1905
        %v1907 = vmul.f32 %v1862, 1.442695
        %v1908 = vpow.pop %v1907
        %v1909 = vmul.f32 %v1863, 1.442695
        %v1910 = vpow.pop %v1909
        %v1911 = vmul.f32 %v1864, 1.442695
        %v1912 = vpow.pop %v1911
        %v1913 = vmul.f32 %v1865, 1.442695
        %v1914 = vpow.pop %v1913
        %v1915 = vmul.f32 %v1866, 1.442695
        %v1916 = vpow.pop %v1915
        %v1917 = vmul.f32 %v1867, 1.442695
        %v1918 = vpow.pop %v1917
        %v1919 = vmul.f32 %v1868, 1.442695
        %v1920 = vpow.pop %v1919
        %v1921 = vmul.f32 %v1869, 1.442695
        %v1922 = vpow.pop %v1921
        %v1923 = vmul.f32 %v1870, 1.442695
        %v1924 = vpow.pop %v1923
        %v1925 = vmul.f32 %v1871, 1.442695
        %v1926 = vpow.pop %v1925
        %v1927 = vmul.f32 %v1872, 1.442695
        %v1928 = vpow.pop %v1927
        %v1929 = vmul.f32 %v1873, 1.442695
        %v1930 = vpow.pop %v1929
        %v1931 = vmul.f32 %v1874, 1.442695
        %v1932 = vpow.pop %v1931
        %v1933 = vmul.f32 %v1875, 1.442695
        %v1934 = vpow.pop %v1933
        %v1935 = vmul.f32 %v1876, 1.442695
        %v1936 = vpow.pop %v1935
        %v1937 = vmul.f32 %v1877, 1.442695
        %v1938 = vpow.pop %v1937
        %v1939 = vmul.f32 %v1878, 1.442695
        %v1940 = vpow.pop %v1939
        %v1941 = vmul.f32 %v1879, 1.442695
        %v1942 = vpow.pop %v1941
        %v1943 = vmul.f32 %v1880, 1.442695
        %v1944 = vpow.pop %v1943
        %v1945 = vadd.f32 %v1882, %v1884
        %v1946 = vadd.f32 %v1945, %v1886
        %v1947 = vadd.f32 %v1946, %v1888
        %v1948 = vadd.f32 %v1947, %v1890
        %v1949 = vadd.f32 %v1948, %v1892
        %v1950 = vadd.f32 %v1949, %v1894
        %v1951 = vadd.f32 %v1950, %v1896
        %v1952 = vadd.f32 %v1951, %v1898
        %v1953 = vadd.f32 %v1952, %v1900
        %v1954 = vadd.f32 %v1953, %v1902
        %v1955 = vadd.f32 %v1954, %v1904
        %v1956 = vadd.f32 %v1955, %v1906
        %v1957 = vadd.f32 %v1956, %v1908
        %v1958 = vadd.f32 %v1957, %v1910
        %v1959 = vadd.f32 %v1958, %v1912
        %v1960 = vadd.f32 %v1959, %v1914
        %v1961 = vadd.f32 %v1960, %v1916
        %v1962 = vadd.f32 %v1961, %v1918
        %v1963 = vadd.f32 %v1962, %v1920
        %v1964 = vadd.f32 %v1963, %v1922
        %v1965 = vadd.f32 %v1964, %v1924
        %v1966 = vadd.f32 %v1965, %v1926
        %v1967 = vadd.f32 %v1966, %v1928
        %v1968 = vadd.f32 %v1967, %v1930
        %v1969 = vadd.f32 %v1968, %v1932
        %v1970 = vadd.f32 %v1969, %v1934
        %v1971 = vadd.f32 %v1970, %v1936
        %v1972 = vadd.f32 %v1971, %v1938
        %v1973 = vadd.f32 %v1972, %v1940
        %v1974 = vadd.f32 %v1973, %v1942
        %v1975 = vadd.f32 %v1974, %v1944
        %v1976 = vrot.slane %v1975, 4
        %v1977 = vadd.f32 %v1975, %v1976
        %v1978 = vrot.slane %v1977, 2
        %v1979 = vadd.f32 %v1977, %v1978
        %v1980 = vrot.slane %v1979, 1
        %v1981 = vadd.f32 %v1979, %v1980
        %v1982 = vpack.c.bf16 %v1884, %v1882
        %v1983 = vpack.c.bf16 %v1888, %v1886
        %v1984 = vpack.c.bf16 %v1892, %v1890
        %v1985 = vpack.c.bf16 %v1896, %v1894
        %v1986 = vpack.c.bf16 %v1900, %v1898
        %v1987 = vpack.c.bf16 %v1904, %v1902
        %v1988 = vpack.c.bf16 %v1908, %v1906
        %v1989 = vpack.c.bf16 %v1912, %v1910
        %v1990 = vpack.c.bf16 %v1916, %v1914
        %v1991 = vpack.c.bf16 %v1920, %v1918
        %v1992 = vpack.c.bf16 %v1924, %v1922
        %v1993 = vpack.c.bf16 %v1928, %v1926
        %v1994 = vpack.c.bf16 %v1932, %v1930
        %v1995 = vpack.c.bf16 %v1936, %v1934
        %v1996 = vpack.c.bf16 %v1940, %v1938
        %v1997 = vpack.c.bf16 %v1944, %v1942
        %v2006 = vunpack.c.l.b16 %v480
        %v2007 = vunpack.c.h.b16 %v480
        %v2008 = vunpack.c.l.b16 %v481
        %v2009 = vunpack.c.h.b16 %v481
        %v2010 = vunpack.c.l.b16 %v482
        %v2011 = vunpack.c.h.b16 %v482
        %v2012 = vunpack.c.l.b16 %v483
        %v2013 = vunpack.c.h.b16 %v483
        %v2014 = vunpack.c.l.b16 %v484
        %v2015 = vunpack.c.h.b16 %v484
        %v2016 = vunpack.c.l.b16 %v485
        %v2017 = vunpack.c.h.b16 %v485
        %v2018 = vunpack.c.l.b16 %v486
        %v2019 = vunpack.c.h.b16 %v486
        %v2020 = vunpack.c.l.b16 %v487
        %v2021 = vunpack.c.h.b16 %v487
        %v2022 = vpack.c.b16 %v2008, %v2006
        %v2023 = vpack.c.b16 %v2009, %v2007
        %v2024 = vpack.c.b16 %v2012, %v2010
        %v2025 = vpack.c.b16 %v2013, %v2011
        %v2026 = vpack.c.b16 %v2016, %v2014
        %v2027 = vpack.c.b16 %v2017, %v2015
        %v2028 = vpack.c.b16 %v2020, %v2018
        %v2029 = vpack.c.b16 %v2021, %v2019
        %2038 = vmatprep.subr.bf16.mxu0 0
        %2039 = vmatpush1.bf16.msra.mxu0 %v1982
        %2040 = vmatprep.subr.bf16.mxu0 0
        %2041 = vmatpush1.bf16.msra.mxu0 %v1983
        %2042 = vmatprep.subr.bf16.mxu0 0
        %2043 = vmatpush1.bf16.msra.mxu0 %v1984
        %2044 = vmatprep.subr.bf16.mxu0 0
        %2045 = vmatpush1.bf16.msra.mxu0 %v1985
        %2046 = vmatprep.subr.bf16.mxu0 0
        %2047 = vmatpush1.bf16.msra.mxu0 %v1986
        %2048 = vmatprep.subr.bf16.mxu0 0
        %2049 = vmatpush1.bf16.msra.mxu0 %v1987
        %2050 = vmatprep.subr.bf16.mxu0 0
        %2051 = vmatpush1.bf16.msra.mxu0 %v1988
        %2052 = vmatprep.subr.bf16.mxu0 0
        %2053 = vmatpush1.bf16.msra.mxu0 %v1989
        %2054 = vmatprep.subr.bf16.mxu0 0
        %2055 = vmatpush1.bf16.msra.mxu0 %v1990
        %2056 = vmatprep.subr.bf16.mxu0 0
        %2057 = vmatpush1.bf16.msra.mxu0 %v1991
        %2058 = vmatprep.subr.bf16.mxu0 0
        %2059 = vmatpush1.bf16.msra.mxu0 %v1992
        %2060 = vmatprep.subr.bf16.mxu0 0
        %2061 = vmatpush1.bf16.msra.mxu0 %v1993
        %2062 = vmatprep.subr.bf16.mxu0 0
        %2063 = vmatpush1.bf16.msra.mxu0 %v1994
        %2064 = vmatprep.subr.bf16.mxu0 0
        %2065 = vmatpush1.bf16.msra.mxu0 %v1995
        %2066 = vmatprep.subr.bf16.mxu0 0
        %2067 = vmatpush1.bf16.msra.mxu0 %v1996
        %2068 = vmatprep.subr.bf16.mxu0 0
        %2069 = vmatpush1.bf16.msra.mxu0 %v1997
        %2070 = vmatprep.mubr.bf16.mxu0 %v2023
        %2071 = vmatmul.mubr.bf16.gmra.mrb[0].mxu0 %v2022
        %v2072 = vpop.f32.mrb[0].mxu0
        %v2073 = vadd.f32 0.0, %v2072
        %v2074 = vpop.f32.mrb[0].mxu0
        %v2075 = vpop.f32.mrb[0].mxu0
        %v2076 = vadd.f32 0.0, %v2075
        %v2077 = vpop.f32.mrb[0].mxu0
        %2078 = vmatprep.mubr.bf16.mxu0 %v2025
        %2079 = vmatmul.mubr.bf16.gmra.mrb[0].mxu0 %v2024
        %v2080 = vpop.f32.mrb[0].mxu0
        %v2081 = vadd.f32 0.0, %v2080
        %v2082 = vpop.f32.mrb[0].mxu0
        %v2083 = vpop.f32.mrb[0].mxu0
        %v2084 = vadd.f32 0.0, %v2083
        %v2085 = vpop.f32.mrb[0].mxu0
        %2086 = vmatprep.mubr.bf16.mxu0 %v2027
        %2087 = vmatmul.mubr.bf16.gmra.mrb[0].mxu0 %v2026
        %v2088 = vpop.f32.mrb[0].mxu0
        %v2089 = vadd.f32 0.0, %v2088
        %v2090 = vpop.f32.mrb[0].mxu0
        %v2091 = vpop.f32.mrb[0].mxu0
        %v2092 = vadd.f32 0.0, %v2091
        %v2093 = vpop.f32.mrb[0].mxu0
        %2094 = vmatprep.mubr.bf16.mxu0 %v2029
        %2095 = vmatmul.mubr.bf16.gmra.mrb[0].mxu0 %v2028
        %v2096 = vpop.f32.mrb[0].mxu0
        %v2097 = vadd.f32 0.0, %v2096
        %v2098 = vpop.f32.mrb[0].mxu0
        %v2099 = vpop.f32.mrb[0].mxu0
        %v2100 = vadd.f32 0.0, %v2099
        %v2101 = vpop.f32.mrb[0].mxu0
        %2102 = vdwg.mxu0
        %v2103 = vrcp.pop %v1981
        %v2104 = vmul.f32 %v2073, %v2103
        %v2105 = vmul.f32 %v2076, %v2103
        %v2106 = vmul.f32 %v2081, %v2103
        %v2107 = vmul.f32 %v2084, %v2103
        %v2108 = vmul.f32 %v2089, %v2103
        %v2109 = vmul.f32 %v2092, %v2103
        %v2110 = vmul.f32 %v2097, %v2103
        %v2111 = vmul.f32 %v2100, %v2103
        %v2112 = vsub.f32 %v1488, %v2104
        %v2113 = vsub.f32 %v1491, %v2105
        %v2114 = vsub.f32 %v1496, %v2106
        %v2115 = vsub.f32 %v1499, %v2107
        %v2116 = vsub.f32 %v1504, %v2108
        %v2117 = vsub.f32 %v1507, %v2109
        %v2118 = vsub.f32 %v1512, %v2110
        %v2119 = vsub.f32 %v1515, %v2111
        %v2120 = vand.u32 2147483647, %v2112
        %v2121 = vand.u32 2147483647, %v2113
        %v2122 = vand.u32 2147483647, %v2114
        %v2123 = vand.u32 2147483647, %v2115
        %v2124 = vand.u32 2147483647, %v2116
        %v2125 = vand.u32 2147483647, %v2117
        %v2126 = vand.u32 2147483647, %v2118
        %v2127 = vand.u32 2147483647, %v2119
        %v2128 = vlaneseq
        %v2129 = vand.u32 %v2128, 127
        %v2130 = vstv 0
        %v2131 = vadd.s32 %v2130, %v2129
        %vm2132 = vcmp.lt.s32.totalorder %v2131, 64
        %v2133 = vsel %vm2132, 1, 0
        %vm2134 = vcmp.eq.s32.totalorder %v2133, 1
        %v2135 = vsel %vm2134, %v2120, 0.0
        %v2136 = vsel %vm2134, %v2121, 0.0
        %v2137 = vsel %vm2134, %v2122, 0.0
        %v2138 = vsel %vm2134, %v2123, 0.0
        %v2139 = vsel %vm2134, %v2124, 0.0
        %v2140 = vsel %vm2134, %v2125, 0.0
        %v2141 = vsel %vm2134, %v2126, 0.0
        %v2142 = vsel %vm2134, %v2127, 0.0
        %v2143 = vadd.f32 %v2135, %v2136
        %v2144 = vadd.f32 %v2143, %v2137
        %v2145 = vadd.f32 %v2144, %v2138
        %v2146 = vadd.f32 %v2145, %v2139
        %v2147 = vadd.f32 %v2146, %v2140
        %v2148 = vadd.f32 %v2147, %v2141
        %v2149 = vadd.f32 %v2148, %v2142
        %2150 = vadd.xlane.f32.xlu0 %v2149
        %v2151 = vpop.xlane.xlu0 %2150
        %v2152 = vrot.slane %v2151, 4
        %v2153 = vadd.f32 %v2151, %v2152
        %v2154 = vrot.slane %v2153, 2
        %v2155 = vadd.f32 %v2153, %v2154
        %v2156 = vrot.slane %v2155, 1
        %v2157 = vadd.f32 %v2155, %v2156
        %s2158 = vtos %v2157
        %s2159 = sadd.f32 %s2158, 0.0
        %v2160 = vpack.c.bf16 %v2105, %v2104
        %v2161 = vpack.c.bf16 %v2107, %v2106
        %v2162 = vpack.c.bf16 %v2109, %v2108
        %v2163 = vpack.c.bf16 %v2111, %v2110
        %2165 = vset.pattern.permute.xlu0 0
        %2166 = vperm.xlu0 %2165, %v504
        %v2167 = vpop.permute.xlu0 %2166
        %2170 = vset.pattern.permute.xlu0 0
        %2171 = vperm.xlu0 %2170, %v505
        %v2172 = vpop.permute.xlu0 %2171
        %2175 = vset.pattern.permute.xlu0 0
        %2176 = vperm.xlu0 %2175, %v506
        %v2177 = vpop.permute.xlu0 %2176
        %2180 = vset.pattern.permute.xlu0 0
        %2181 = vperm.xlu0 %2180, %v507
        %v2182 = vpop.permute.xlu0 %2181
        %2185 = vset.pattern.permute.xlu0 0
        %2186 = vperm.xlu0 %2185, %v508
        %v2187 = vpop.permute.xlu0 %2186
        %2190 = vset.pattern.permute.xlu0 0
        %2191 = vperm.xlu0 %2190, %v509
        %v2192 = vpop.permute.xlu0 %2191
        %2195 = vset.pattern.permute.xlu0 0
        %2196 = vperm.xlu0 %2195, %v510
        %v2197 = vpop.permute.xlu0 %2196
        %2200 = vset.pattern.permute.xlu0 0
        %2201 = vperm.xlu0 %2200, %v511
        %v2202 = vpop.permute.xlu0 %2201
        %2205 = vset.pattern.permute.xlu0 0
        %2206 = vperm.xlu0 %2205, %v512
        %v2207 = vpop.permute.xlu0 %2206
        %2210 = vset.pattern.permute.xlu0 0
        %2211 = vperm.xlu0 %2210, %v513
        %v2212 = vpop.permute.xlu0 %2211
        %2215 = vset.pattern.permute.xlu0 0
        %2216 = vperm.xlu0 %2215, %v514
        %v2217 = vpop.permute.xlu0 %2216
        %2220 = vset.pattern.permute.xlu0 0
        %2221 = vperm.xlu0 %2220, %v515
        %v2222 = vpop.permute.xlu0 %2221
        %2225 = vset.pattern.permute.xlu0 0
        %2226 = vperm.xlu0 %2225, %v516
        %v2227 = vpop.permute.xlu0 %2226
        %2230 = vset.pattern.permute.xlu0 0
        %2231 = vperm.xlu0 %2230, %v517
        %v2232 = vpop.permute.xlu0 %2231
        %2235 = vset.pattern.permute.xlu0 0
        %2236 = vperm.xlu0 %2235, %v518
        %v2237 = vpop.permute.xlu0 %2236
        %2240 = vset.pattern.permute.xlu0 0
        %2241 = vperm.xlu0 %2240, %v519
        %v2242 = vpop.permute.xlu0 %2241
        %v2260 = vunpack.c.l.b16 %v488
        %v2261 = vunpack.c.l.b16 %v489
        %v2262 = vunpack.c.l.b16 %v490
        %v2263 = vunpack.c.l.b16 %v491
        %v2264 = vunpack.c.l.b16 %v492
        %v2265 = vunpack.c.l.b16 %v493
        %v2266 = vunpack.c.l.b16 %v494
        %v2267 = vunpack.c.l.b16 %v495
        %v2268 = vunpack.c.l.b16 %v496
        %v2269 = vunpack.c.l.b16 %v497
        %v2270 = vunpack.c.l.b16 %v498
        %v2271 = vunpack.c.l.b16 %v499
        %v2272 = vunpack.c.l.b16 %v500
        %v2273 = vunpack.c.l.b16 %v501
        %v2274 = vunpack.c.l.b16 %v502
        %v2275 = vunpack.c.l.b16 %v503
        %v2276 = vpack.c.b16 %v2261, %v2260
        %v2277 = vpack.c.b16 %v2263, %v2262
        %v2278 = vpack.c.b16 %v2265, %v2264
        %v2279 = vpack.c.b16 %v2267, %v2266
        %v2280 = vpack.c.b16 %v2269, %v2268
        %v2281 = vpack.c.b16 %v2271, %v2270
        %v2282 = vpack.c.b16 %v2273, %v2272
        %v2283 = vpack.c.b16 %v2275, %v2274
        %v2285 = vsel %vm1602, %v2276, 0
        %v2288 = vsel %vm1602, %v2277, 0
        %v2291 = vsel %vm1602, %v2278, 0
        %v2294 = vsel %vm1602, %v2279, 0
        %v2297 = vsel %vm1602, %v2280, 0
        %v2300 = vsel %vm1602, %v2281, 0
        %v2303 = vsel %vm1602, %v2282, 0
        %v2306 = vsel %vm1602, %v2283, 0
        %2308 = vmatprep.subr.bf16.mxu0 0
        %2309 = vmatpush1.bf16.msra.mxu0 %v2160
        %2310 = vmatprep.subr.bf16.mxu0 0
        %2311 = vmatpush1.bf16.msra.mxu0 %v2161
        %2312 = vmatprep.subr.bf16.mxu0 0
        %2313 = vmatpush1.bf16.msra.mxu0 %v2162
        %2314 = vmatprep.subr.bf16.mxu0 0
        %2315 = vmatpush1.bf16.msra.mxu0 %v2163
        %2316 = vmatprep.subr.bf16.mxu0 0
        %2317 = vmatpush1.bf16.msra.mxu0 0
        %2318 = vmatprep.subr.bf16.mxu0 0
        %2319 = vmatpush1.bf16.msra.mxu0 0
        %2320 = vmatprep.subr.bf16.mxu0 0
        %2321 = vmatpush1.bf16.msra.mxu0 0
        %2322 = vmatprep.subr.bf16.mxu0 0
        %2323 = vmatpush1.bf16.msra.mxu0 0
        %2324 = vmatprep.subr.bf16.mxu0 0
        %2325 = vmatpush1.bf16.msra.mxu0 0
        %2326 = vmatprep.subr.bf16.mxu0 0
        %2327 = vmatpush1.bf16.msra.mxu0 0
        %2328 = vmatprep.subr.bf16.mxu0 0
        %2329 = vmatpush1.bf16.msra.mxu0 0
        %2330 = vmatprep.subr.bf16.mxu0 0
        %2331 = vmatpush1.bf16.msra.mxu0 0
        %2332 = vmatprep.subr.bf16.mxu0 0
        %2333 = vmatpush1.bf16.msra.mxu0 0
        %2334 = vmatprep.subr.bf16.mxu0 0
        %2335 = vmatpush1.bf16.msra.mxu0 0
        %2336 = vmatprep.subr.bf16.mxu0 0
        %2337 = vmatpush1.bf16.msra.mxu0 0
        %2338 = vmatprep.subr.bf16.mxu0 0
        %2339 = vmatpush1.bf16.msra.mxu0 0
        %2340 = vmatprep.mubr.bf16.mxu0 0
        %2341 = vmatmul.mubr.bf16.gmra.mrb[0].mxu0 %v2285
        %v2342 = vpop.f32.mrb[0].mxu0
        %v2343 = vadd.f32 %v2167, %v2342
        %v2344 = vpop.f32.mrb[0].mxu0
        %v2345 = vpop.f32.mrb[0].mxu0
        %v2346 = vadd.f32 %v2172, %v2345
        %v2347 = vpop.f32.mrb[0].mxu0
        %2348 = vmatprep.mubr.bf16.mxu0 0
        %2349 = vmatmul.mubr.bf16.gmra.mrb[0].mxu0 %v2288
        %v2350 = vpop.f32.mrb[0].mxu0
        %v2351 = vadd.f32 %v2177, %v2350
        %v2352 = vpop.f32.mrb[0].mxu0
        %v2353 = vpop.f32.mrb[0].mxu0
        %v2354 = vadd.f32 %v2182, %v2353
        %v2355 = vpop.f32.mrb[0].mxu0
        %2356 = vmatprep.mubr.bf16.mxu0 0
        %2357 = vmatmul.mubr.bf16.gmra.mrb[0].mxu0 %v2291
        %v2358 = vpop.f32.mrb[0].mxu0
        %v2359 = vadd.f32 %v2187, %v2358
        %v2360 = vpop.f32.mrb[0].mxu0
        %v2361 = vpop.f32.mrb[0].mxu0
        %v2362 = vadd.f32 %v2192, %v2361
        %v2363 = vpop.f32.mrb[0].mxu0
        %2364 = vmatprep.mubr.bf16.mxu0 0
        %2365 = vmatmul.mubr.bf16.gmra.mrb[0].mxu0 %v2294
        %v2366 = vpop.f32.mrb[0].mxu0
        %v2367 = vadd.f32 %v2197, %v2366
        %v2368 = vpop.f32.mrb[0].mxu0
        %v2369 = vpop.f32.mrb[0].mxu0
        %v2370 = vadd.f32 %v2202, %v2369
        %v2371 = vpop.f32.mrb[0].mxu0
        %2372 = vmatprep.mubr.bf16.mxu0 0
        %2373 = vmatmul.mubr.bf16.gmra.mrb[0].mxu0 %v2297
        %v2374 = vpop.f32.mrb[0].mxu0
        %v2375 = vadd.f32 %v2207, %v2374
        %v2376 = vpop.f32.mrb[0].mxu0
        %v2377 = vpop.f32.mrb[0].mxu0
        %v2378 = vadd.f32 %v2212, %v2377
        %v2379 = vpop.f32.mrb[0].mxu0
        %2380 = vmatprep.mubr.bf16.mxu0 0
        %2381 = vmatmul.mubr.bf16.gmra.mrb[0].mxu0 %v2300
        %v2382 = vpop.f32.mrb[0].mxu0
        %v2383 = vadd.f32 %v2217, %v2382
        %v2384 = vpop.f32.mrb[0].mxu0
        %v2385 = vpop.f32.mrb[0].mxu0
        %v2386 = vadd.f32 %v2222, %v2385
        %v2387 = vpop.f32.mrb[0].mxu0
        %2388 = vmatprep.mubr.bf16.mxu0 0
        %2389 = vmatmul.mubr.bf16.gmra.mrb[0].mxu0 %v2303
        %v2390 = vpop.f32.mrb[0].mxu0
        %v2391 = vadd.f32 %v2227, %v2390
        %v2392 = vpop.f32.mrb[0].mxu0
        %v2393 = vpop.f32.mrb[0].mxu0
        %v2394 = vadd.f32 %v2232, %v2393
        %v2395 = vpop.f32.mrb[0].mxu0
        %2396 = vmatprep.mubr.bf16.mxu0 0
        %2397 = vmatmul.mubr.bf16.gmra.mrb[0].mxu0 %v2306
        %v2398 = vpop.f32.mrb[0].mxu0
        %v2399 = vadd.f32 %v2237, %v2398
        %v2400 = vpop.f32.mrb[0].mxu0
        %v2401 = vpop.f32.mrb[0].mxu0
        %v2402 = vadd.f32 %v2242, %v2401
        %v2403 = vpop.f32.mrb[0].mxu0
        %2404 = vdwg.mxu0
        %v2405 = vadd.f32 %v1173, %v2343
        %v2406 = vadd.f32 %v1174, %v2346
        %v2407 = vadd.f32 %v1175, %v2351
        %v2408 = vadd.f32 %v1176, %v2354
        %v2409 = vadd.f32 %v1177, %v2359
        %v2410 = vadd.f32 %v1178, %v2362
        %v2411 = vadd.f32 %v1179, %v2367
        %v2412 = vadd.f32 %v1180, %v2370
        %v2413 = vadd.f32 %v1181, %v2375
        %v2414 = vadd.f32 %v1182, %v2378
        %v2415 = vadd.f32 %v1183, %v2383
        %v2416 = vadd.f32 %v1184, %v2386
        %v2417 = vadd.f32 %v1185, %v2391
        %v2418 = vadd.f32 %v1186, %v2394
        %v2419 = vadd.f32 %v1187, %v2399
        %v2420 = vadd.f32 %v1188, %v2402
        %2421 = vst [vmem:[%s383] sm:$0xff] %v2405
        %2422 = vst [vmem:[%s383 + $0x8] sm:$0xff] %v2406
        %2423 = vst [vmem:[%s383 + $0x10] sm:$0xff] %v2407
        %2424 = vst [vmem:[%s383 + $0x18] sm:$0xff] %v2408
        %2425 = vst [vmem:[%s383 + $0x20] sm:$0xff] %v2409
        %2426 = vst [vmem:[%s383 + $0x28] sm:$0xff] %v2410
        %2427 = vst [vmem:[%s383 + $0x30] sm:$0xff] %v2411
        %2428 = vst [vmem:[%s383 + $0x38] sm:$0xff] %v2412
        %2429 = vst [vmem:[%s383 + $0x40] sm:$0xff] %v2413
        %2430 = vst [vmem:[%s383 + $0x48] sm:$0xff] %v2414
        %2431 = vst [vmem:[%s383 + $0x50] sm:$0xff] %v2415
        %2432 = vst [vmem:[%s383 + $0x58] sm:$0xff] %v2416
        %2433 = vst [vmem:[%s383 + $0x60] sm:$0xff] %v2417
        %2434 = vst [vmem:[%s383 + $0x68] sm:$0xff] %v2418
        %2435 = vst [vmem:[%s383 + $0x70] sm:$0xff] %v2419
        %2436 = vst [vmem:[%s383 + $0x78] sm:$0xff] %v2420
        %v2437 = vstv %s2159
        %2438 = vst [vmem:[%s389] sm:$0x1] %v2437
        %s2439 = sand.u32 %s252, 1
        %s2440 = scalar_lea.sflag [#allocation3], %s2439
        %s2441 = sand.u32 %s252, 1
        %s2442 = smul.addr %s2441, 128
        %s2443 = scalar_lea.vmem [#allocation2], %s2442
        %s2444 = sand.u32 %s278, 1
        %s2445 = scalar_lea.sflag [#allocation5], %s2444
        %s2446 = sand.u32 %s278, 1
        %s2447 = scalar_lea.vmem [#allocation4], %s2446
        // Predicated region
        $region61: #{tpu_custom_call.1} parent=59 // pred_check
          %p2448 = pneg %p262
        $region62: #{tpu_custom_call.1} parent=59 // pred_check_branch
          %2450 = sbr.rel (%p2448) target = $region64
        $region63: #{tpu_custom_call.1} parent=59 // pred_region
          %s2452 = ssub.s32 2048, 2048
          %2453 = vsyncadd %s2440, %s2452
          %s2454 = smul.addr %s29, 16
          %s2455 = smul.addr %s2454, 128
          %s2456 = scalar_lea.hbm %s10, %s2455
          %s2457 = sshll.u32 %s2443, 4
          %s2458 = int_to_ptr.vmem [resolvable:$true] %s2457
          %2463 = dma.vmem_to_hbm [thread:$0]  %s2458, 2048, %s2456, %s2440, 128, 128, 8
        $region64: #{tpu_custom_call.1} parent=59 // pred_fallthru
          _
        // Predicated region
        $region65: #{tpu_custom_call.1} parent=59 // pred_check
          %p2464 = pneg %p288
        $region66: #{tpu_custom_call.1} parent=59 // pred_check_branch
          %2466 = sbr.rel (%p2464) target = $region68
        $region67: #{tpu_custom_call.1} parent=59 // pred_region
          %s2468 = ssub.s32 16, 16
          %2469 = vsyncadd %s2445, %s2468
          %s2470 = smul.addr %s29, 16
          %s2471 = scalar_lea.hbm %s11, %s2470
          %s2473 = sshll.u32 %s2447, 4
          %s2474 = int_to_ptr.vmem [resolvable:$true] %s2473
          %2476 = dma.vmem_to_hbm [thread:$0]  %s2474, 16, %s2471, %s2445
        $region68: #{tpu_custom_call.1} parent=59 // pred_fallthru
          _
      $region60: #{tpu_custom_call.1} parent=5 // pred_fallthru
        _
      %p2477 = scmp.le.s32.totalorder 2, %s24
      // Predicated region
      $region69: #{tpu_custom_call.1} parent=5 // pred_check
        %p2478 = pneg %p2477
      $region70: #{tpu_custom_call.1} parent=5 // pred_check_branch
        %2480 = sbr.rel (%p2478) target = $region72
      $region71: #{tpu_custom_call.1} parent=5 // pred_region
        %s2481 = ssub.s32 %s24, 2
        // Predicated region
        $region73: #{tpu_custom_call.1} parent=71 // pred_check
          %p2482 = pneg %p268
        $region74: #{tpu_custom_call.1} parent=71 // pred_check_branch
          %2484 = sbr.rel (%p2482) target = $region76
        $region75: #{tpu_custom_call.1} parent=71 // pred_region
          %s2485 = sand.u32 %s253, 1
          %s2486 = scalar_lea.sflag [#allocation3], %s2485
          %s2487 = sand.u32 %s253, 1
          %s2488 = smul.addr %s2487, 128
          %s2489 = scalar_lea.vmem [#allocation2], %s2488
          %2490 = dma.done %s2486, 2048
        $region76: #{tpu_custom_call.1} parent=71 // pred_fallthru
          _
        // Predicated region
        $region77: #{tpu_custom_call.1} parent=71 // pred_check
          %p2491 = pneg %p294
        $region78: #{tpu_custom_call.1} parent=71 // pred_check_branch
          %2493 = sbr.rel (%p2491) target = $region80
        $region79: #{tpu_custom_call.1} parent=71 // pred_region
          %s2494 = sand.u32 %s279, 1
          %s2495 = scalar_lea.sflag [#allocation5], %s2494
          %s2496 = sand.u32 %s279, 1
          %s2497 = scalar_lea.vmem [#allocation4], %s2496
          %2498 = dma.done %s2495, 16
        $region80: #{tpu_custom_call.1} parent=71 // pred_fallthru
          _
      $region72: #{tpu_custom_call.1} parent=5 // pred_fallthru
        _
    $region6: #{tpu_custom_call.1} parent=1 // loop_footer
      %s28 = sadd.s32 1, %s24
    $region7: #{tpu_custom_call.1} parent=1 // loop_footer_branch
      %23 = sbr.rel target = $region3
    $region8: #{tpu_custom_call.1} parent=1 // loop_exit
      _
    %2499 = vsyncpa [#allocation3], 1
    %s2500 = scalar_lea.sflag [#allocation3], 1
    %2501 = vsyncpa %s2500, 1
    %2502 = vsyncpa [#allocation5], 1
    %s2503 = scalar_lea.sflag [#allocation5], 1
    %2504 = vsyncpa %s2503, 1

</llo_original>
